<compile_context>
chip_gen: v7x
topology: tpu7x:2x2x1
jax: 0.10.0
libtpu: 0.0.40
codegen_flags: <defaults>
</compile_context>

<pallas_src>
import jax
import jax.numpy as jnp
from jax.experimental import pallas as pl
from jax.experimental.pallas import tpu as pltpu


def _round_up(n, m):
    return ((n + m - 1) // m) * m


def _ae_kernel(x_ref,
               w1_ref, b1_ref, w2_ref, b2_ref, w3_ref, b3_ref,
               w4_ref, b4_ref, w5_ref, b5_ref, w6_ref, b6_ref,
               o_ref):
    """One batch tile of the full autoencoder forward.

    x_ref: (tile_b, D) f32 (cast to bf16 here). Weights bf16 (in,out),
    biases f32 (1,out). Latent bounds are pre-folded into w4/b4, so the
    latent nonlinearity is a plain sigmoid; padded latent lanes hit zero
    rows of w4 and contribute nothing.
    """
    bf16 = jnp.bfloat16

    x = x_ref[...].astype(bf16)

    h = jnp.dot(x, w1_ref[...], preferred_element_type=jnp.float32) + b1_ref[...]
    h = jnp.maximum(h, 0.0).astype(bf16)

    h = jnp.dot(h, w2_ref[...], preferred_element_type=jnp.float32) + b2_ref[...]
    h = jnp.maximum(h, 0.0).astype(bf16)

    z = jnp.dot(h, w3_ref[...], preferred_element_type=jnp.float32) + b3_ref[...]
    z = jax.nn.sigmoid(z).astype(bf16)          # lat_lb/lat_ub folded into w4,b4

    h = jnp.dot(z, w4_ref[...], preferred_element_type=jnp.float32) + b4_ref[...]
    h = jnp.maximum(h, 0.0).astype(bf16)

    h = jnp.dot(h, w5_ref[...], preferred_element_type=jnp.float32) + b5_ref[...]
    h = jnp.maximum(h, 0.0).astype(bf16)

    out = jnp.dot(h, w6_ref[...], preferred_element_type=jnp.float32) + b6_ref[...]
    o_ref[...] = out.astype(o_ref.dtype)
    # TODO(synk): Decoder out_bounds path (out_lb + (out_ub-out_lb)*sigmoid) is
    # not implemented; the module default is out_bounds=None.


def prepare_params(params, lat_lb=0.0, lat_ub=1.0):
    """One-time parameter prep (hoisted out of the per-call hot path).

    - Folds the latent bounds into the first decoder layer (in f32):
        w4' = (ub-lb)*w4,  b4' = b4 + lb*colsum(w4)
    - Pads the latent path to 128 lanes (zero cols of w3/b3, zero rows of the
      *folded* w4) so the sigmoid / latent matmuls are lane-dense.
    - Casts weights to bf16 (MXU native); biases stay f32.
    """
    w1, b1, w2, b2, w3, b3, w4, b4, w5, b5, w6, b6 = params
    latent_dim = w3.shape[1]
    lp = _round_up(max(latent_dim, 1), 128)

    scale = jnp.float32(lat_ub - lat_lb)
    w4f = w4 * scale
    b4f = b4 + jnp.float32(lat_lb) * jnp.sum(w4, axis=0, keepdims=True)

    # Pad AFTER the fold: padded latent lanes produce sigmoid(0)=0.5, which
    # multiplies the zero rows appended to w4f and contributes nothing.
    w3p = jnp.zeros((w3.shape[0], lp), jnp.float32).at[:, :latent_dim].set(w3)
    b3p = jnp.zeros((1, lp), jnp.float32).at[:, :latent_dim].set(b3)
    w4p = jnp.zeros((lp, w4.shape[1]), jnp.float32).at[:latent_dim, :].set(w4f)

    ws = [w1, w2, w3p, w4p, w5, w6]
    bs = [b1, b2, b3p, b4f, b5, b6]
    ws = [w.astype(jnp.bfloat16) for w in ws]          # MXU-native weights
    bs = [b.astype(jnp.float32) for b in bs]           # f32 bias add / elementwise

    prepped = []
    for w, b in zip(ws, bs):
        prepped += [w, b]
    return tuple(jax.device_put(p) for p in prepped)


def autoencoder_forward(x, prepped_params, *, tile_b=None):
    """Full Autoencoder forward as one gridded Pallas call.

    x:              (batch, input_dim) float32, passed unpadded.
    prepped_params: output of prepare_params().
    Returns (batch, input_dim) float32.
    """
    batch, input_dim = x.shape
    w1 = prepped_params[0]
    w3p = prepped_params[4]
    assert w1.shape[0] == input_dim, "x feature dim must match w1"
    lp = w3p.shape[1]                               # padded latent width (128)

    # ---- batch tile selection ----------------------------------------------
    if tile_b is None:
        tile_b = 4096                               # amortize ~0.35us/step overhead

    # Guarantee >= 2 grid steps whenever the batch allows, so the "parallel"
    # axis can be sharded across v7x's 2 TensorCores.
    half = max(16, _round_up(pl.cdiv(batch, 2), 16))
    tile_b = min(tile_b, half)

    # Cap the per-step VMEM footprint (2x-buffered f32 in/out tiles + f32/bf16
    # activation temporaries) well under v7x's 64 MiB physical VMEM.
    per_row_bytes = 4 * input_dim * 4 + (128 + 64 + lp + 64 + 128 + input_dim) * 6
    max_tile_rows = max(16, ((40 << 20) // per_row_bytes) // 16 * 16)
    tile_b = min(tile_b, max_tile_rows)
    tile_b = max(16, _round_up(tile_b, 16))         # bf16 sublane packing = 16 rows

    grid = (pl.cdiv(batch, tile_b),)                # ragged last block handled by Pallas

    # ---- block specs ---------------------------------------------------------
    # Streamed operands: batch-tiled, unpadded feature dim (== full array dim,
    # so the (8,128) rule is satisfied). Parameters: constant index_map ->
    # fetched once and VMEM-resident across grid steps.
    x_spec = pl.BlockSpec((tile_b, input_dim), lambda i: (i, 0))
    out_spec = pl.BlockSpec((tile_b, input_dim), lambda i: (i, 0))

    def const_spec(arr):
        return pl.BlockSpec(arr.shape, lambda i: (0, 0))

    in_specs = [x_spec] + [const_spec(p) for p in prepped_params]
    operands = [x] + list(prepped_params)

    # ---- VMEM budget (headroom for double-buffering + activations) ----------
    param_bytes = sum(int(p.size) * p.dtype.itemsize for p in prepped_params)
    stream_bytes = 2 * (tile_b * input_dim * 4) * 2           # 2x-buffered f32 in + out
    act_bytes = tile_b * (128 + 64 + lp + 64 + 128 + input_dim) * 6
    vmem_limit = int(min(max(stream_bytes + 2 * param_bytes + act_bytes + (4 << 20),
                             8 << 20), 48 << 20))

    # ---- cost estimate (lets XLA overlap surrounding ops) --------------------
    flops = 2 * batch * (input_dim * 128 + 128 * 64 + 64 * lp
                         + lp * 64 + 64 * 128 + 128 * input_dim)
    bytes_accessed = batch * input_dim * 4 * 2 + param_bytes
    cost = pl.CostEstimate(flops=flops, transcendentals=batch * lp,
                           bytes_accessed=bytes_accessed)

    out = pl.pallas_call(
        _ae_kernel,
        out_shape=jax.ShapeDtypeStruct((batch, input_dim), jnp.float32),
        grid=grid,
        in_specs=in_specs,
        out_specs=out_spec,
        compiler_params=pltpu.CompilerParams(
            dimension_semantics=("parallel",),
            vmem_limit_bytes=vmem_limit,
        ),
        cost_estimate=cost,
    )(*operands)

    return out


def init_params(key, input_dim, latent_dim):
    """Deterministic synthetic parameters matching the PyTorch module shapes.

    PyTorch Linear(in, out) stores weight as (out, in); we keep the transpose
    (in, out) so the kernel computes y = x @ W + b. Biases are (1, out) rows.
    """
    dims = [(input_dim, 128), (128, 64), (64, latent_dim),        # encoder
            (latent_dim, 64), (64, 128), (128, input_dim)]         # decoder
    params = []
    for (d_in, d_out) in dims:
        key, kw, kb = jax.random.split(key, 3)
        scale = 1.0 / jnp.sqrt(jnp.float32(d_in))
        w = jax.random.uniform(kw, (d_in, d_out), jnp.float32, -scale, scale)
        b = jax.random.uniform(kb, (1, d_out), jnp.float32, -scale, scale)
        params += [w, b]
    return tuple(params)


def _reference_forward_f32(x, params, lat_lb, lat_ub):
    """Pure-f32 reference matching the PyTorch module semantics."""
    w1, b1, w2, b2, w3, b3, w4, b4, w5, b5, w6, b6 = params
    h = jnp.maximum(x @ w1 + b1, 0.0)
    h = jnp.maximum(h @ w2 + b2, 0.0)
    z = lat_lb + (lat_ub - lat_lb) * jax.nn.sigmoid(h @ w3 + b3)
    h = jnp.maximum(z @ w4 + b4, 0.0)
    h = jnp.maximum(h @ w5 + b5, 0.0)
    return h @ w6 + b6


def _reference_forward_bf16(x, params, lat_lb, lat_ub):
    """Reference mirroring the kernel's bf16-matmul / f32-accumulate scheme."""
    w1, b1, w2, b2, w3, b3, w4, b4, w5, b5, w6, b6 = params
    bf = jnp.bfloat16

    def mm(a, w):
        return jnp.dot(a.astype(bf), w.astype(bf), preferred_element_type=jnp.float32)

    h = jnp.maximum(mm(x, w1) + b1, 0.0)
    h = jnp.maximum(mm(h, w2) + b2, 0.0)
    z = lat_lb + (lat_ub - lat_lb) * jax.nn.sigmoid(mm(h, w3) + b3)
    h = jnp.maximum(mm(z, w4) + b4, 0.0)
    h = jnp.maximum(mm(h, w5) + b5, 0.0)
    return mm(h, w6) + b6


if __name__ == "__main__":
    batch, input_dim, latent_dim = 200, 32, 8
    lat_lb, lat_ub = -1.0, 1.0   # non-trivial bounds -> exercises the weight fold

    key = jax.random.PRNGKey(0)
    key, kx = jax.random.split(key)
    x = jax.random.normal(kx, (batch, input_dim), jnp.float32)
    params = init_params(key, input_dim, latent_dim)

    # One-time (hoisted) parameter prep; the per-call path is just pallas_call.
    prepped = prepare_params(params, lat_lb, lat_ub)
    fwd = jax.jit(lambda xx: autoencoder_forward(xx, prepped))

    # batch=200 with the default tile heuristic -> tile_b=112, grid=(2,):
    # exercises the >=2-step split (v7x megacore) and the ragged last block.
    out = fwd(x)
    out = jax.block_until_ready(out)
    assert out.shape == (batch, input_dim)

    ref_bf16 = _reference_forward_bf16(x, params, lat_lb, lat_ub)
    assert jnp.allclose(out, ref_bf16, atol=1e-2, rtol=1e-2), float(
        jnp.max(jnp.abs(out - ref_bf16)))

    ref_f32 = _reference_forward_f32(x, params, lat_lb, lat_ub)
    assert jnp.allclose(out, ref_f32, atol=5e-2, rtol=5e-2), float(
        jnp.max(jnp.abs(out - ref_f32)))

    print("KERNEL_OK")
</pallas_src>

<mosaic_0001>
module attributes {stable_mosaic.version = 11 : i64} {
  func.func @_ae_kernel(%arg0: i32, %arg1: memref<112x32xf32, #tpu.memory_space<vmem>>, %arg2: memref<32x128xbf16, #tpu.memory_space<vmem>>, %arg3: memref<1x128xf32, #tpu.memory_space<vmem>>, %arg4: memref<128x64xbf16, #tpu.memory_space<vmem>>, %arg5: memref<1x64xf32, #tpu.memory_space<vmem>>, %arg6: memref<64x128xbf16, #tpu.memory_space<vmem>>, %arg7: memref<1x128xf32, #tpu.memory_space<vmem>>, %arg8: memref<128x64xbf16, #tpu.memory_space<vmem>>, %arg9: memref<1x64xf32, #tpu.memory_space<vmem>>, %arg10: memref<64x128xbf16, #tpu.memory_space<vmem>>, %arg11: memref<1x128xf32, #tpu.memory_space<vmem>>, %arg12: memref<128x32xbf16, #tpu.memory_space<vmem>>, %arg13: memref<1x32xf32, #tpu.memory_space<vmem>>, %arg14: memref<112x32xf32, #tpu.memory_space<vmem>>) attributes {dimension_semantics = [#tpu.dimension_semantics<parallel>], iteration_bounds = array<i64: 2>, scalar_prefetch = 0 : i64, scratch_operands = 0 : i64, tpu.core_type = #tpu.core_type<tc>, window_params = [{transform_indices = @transform_0, window_bounds = array<i64: 112, 32>}, {pipeline_mode = #tpu.pipeline_mode<synchronous>, transform_indices = @transform_1, window_bounds = array<i64: 32, 128>}, {pipeline_mode = #tpu.pipeline_mode<synchronous>, transform_indices = @transform_2, window_bounds = array<i64: 1, 128>}, {pipeline_mode = #tpu.pipeline_mode<synchronous>, transform_indices = @transform_3, window_bounds = array<i64: 128, 64>}, {pipeline_mode = #tpu.pipeline_mode<synchronous>, transform_indices = @transform_4, window_bounds = array<i64: 1, 64>}, {pipeline_mode = #tpu.pipeline_mode<synchronous>, transform_indices = @transform_5, window_bounds = array<i64: 64, 128>}, {pipeline_mode = #tpu.pipeline_mode<synchronous>, transform_indices = @transform_6, window_bounds = array<i64: 1, 128>}, {pipeline_mode = #tpu.pipeline_mode<synchronous>, transform_indices = @transform_7, window_bounds = array<i64: 128, 64>}, {pipeline_mode = #tpu.pipeline_mode<synchronous>, transform_indices = @transform_8, window_bounds = array<i64: 1, 64>}, {pipeline_mode = #tpu.pipeline_mode<synchronous>, transform_indices = @transform_9, window_bounds = array<i64: 64, 128>}, {pipeline_mode = #tpu.pipeline_mode<synchronous>, transform_indices = @transform_10, window_bounds = array<i64: 1, 128>}, {pipeline_mode = #tpu.pipeline_mode<synchronous>, transform_indices = @transform_11, window_bounds = array<i64: 128, 32>}, {pipeline_mode = #tpu.pipeline_mode<synchronous>, transform_indices = @transform_12, window_bounds = array<i64: 1, 32>}, {transform_indices = @transform_13, window_bounds = array<i64: 112, 32>}]} {
    %c0 = arith.constant 0 : index
    %c0_0 = arith.constant 0 : index
    %0 = vector.load %arg1[%c0, %c0_0] : memref<112x32xf32, #tpu.memory_space<vmem>>, vector<112x32xf32>
    %1 = arith.truncf %0 : vector<112x32xf32> to vector<112x32xbf16>
    %c0_1 = arith.constant 0 : index
    %c0_2 = arith.constant 0 : index
    %2 = vector.load %arg2[%c0_1, %c0_2] : memref<32x128xbf16, #tpu.memory_space<vmem>>, vector<32x128xbf16>
    %cst = arith.constant dense<0.000000e+00> : vector<112x128xf32>
    %3 = tpu.matmul %1, %2, %cst {dimension_numbers = #tpu.dot_dimension_numbers<[1], [0], [0], [1], [0, 0, 1, 1], [], []>} : vector<112x32xbf16>, vector<32x128xbf16>, vector<112x128xf32> -> vector<112x128xf32>
    %c0_3 = arith.constant 0 : index
    %c0_4 = arith.constant 0 : index
    %4 = vector.load %arg3[%c0_3, %c0_4] : memref<1x128xf32, #tpu.memory_space<vmem>>, vector<1x128xf32>
    %5 = vector.broadcast %4 : vector<1x128xf32> to vector<112x128xf32>
    %6 = arith.addf %3, %5 : vector<112x128xf32>
    %cst_5 = arith.constant 0.000000e+00 : f32
    %7 = vector.broadcast %cst_5 : f32 to vector<112x128xf32>
    %8 = arith.maximumf %6, %7 : vector<112x128xf32>
    %9 = arith.truncf %8 : vector<112x128xf32> to vector<112x128xbf16>
    %c0_6 = arith.constant 0 : index
    %c0_7 = arith.constant 0 : index
    %10 = vector.load %arg4[%c0_6, %c0_7] : memref<128x64xbf16, #tpu.memory_space<vmem>>, vector<128x64xbf16>
    %cst_8 = arith.constant dense<0.000000e+00> : vector<112x64xf32>
    %11 = tpu.matmul %9, %10, %cst_8 {dimension_numbers = #tpu.dot_dimension_numbers<[1], [0], [0], [1], [0, 0, 1, 1], [], []>} : vector<112x128xbf16>, vector<128x64xbf16>, vector<112x64xf32> -> vector<112x64xf32>
    %c0_9 = arith.constant 0 : index
    %c0_10 = arith.constant 0 : index
    %12 = vector.load %arg5[%c0_9, %c0_10] : memref<1x64xf32, #tpu.memory_space<vmem>>, vector<1x64xf32>
    %13 = vector.broadcast %12 : vector<1x64xf32> to vector<112x64xf32>
    %14 = arith.addf %11, %13 : vector<112x64xf32>
    %cst_11 = arith.constant 0.000000e+00 : f32
    %15 = vector.broadcast %cst_11 : f32 to vector<112x64xf32>
    %16 = arith.maximumf %14, %15 : vector<112x64xf32>
    %17 = arith.truncf %16 : vector<112x64xf32> to vector<112x64xbf16>
    %c0_12 = arith.constant 0 : index
    %c0_13 = arith.constant 0 : index
    %18 = vector.load %arg6[%c0_12, %c0_13] : memref<64x128xbf16, #tpu.memory_space<vmem>>, vector<64x128xbf16>
    %cst_14 = arith.constant dense<0.000000e+00> : vector<112x128xf32>
    %19 = tpu.matmul %17, %18, %cst_14 {dimension_numbers = #tpu.dot_dimension_numbers<[1], [0], [0], [1], [0, 0, 1, 1], [], []>} : vector<112x64xbf16>, vector<64x128xbf16>, vector<112x128xf32> -> vector<112x128xf32>
    %c0_15 = arith.constant 0 : index
    %c0_16 = arith.constant 0 : index
    %20 = vector.load %arg7[%c0_15, %c0_16] : memref<1x128xf32, #tpu.memory_space<vmem>>, vector<1x128xf32>
    %21 = vector.broadcast %20 : vector<1x128xf32> to vector<112x128xf32>
    %22 = arith.addf %19, %21 : vector<112x128xf32>
    %23 = arith.negf %22 : vector<112x128xf32>
    %24 = math.exp %23 : vector<112x128xf32>
    %cst_17 = arith.constant 1.000000e+00 : f32
    %25 = vector.broadcast %cst_17 : f32 to vector<112x128xf32>
    %26 = arith.addf %25, %24 : vector<112x128xf32>
    %27 = arith.divf %25, %26 : vector<112x128xf32>
    %28 = arith.truncf %27 : vector<112x128xf32> to vector<112x128xbf16>
    %c0_18 = arith.constant 0 : index
    %c0_19 = arith.constant 0 : index
    %29 = vector.load %arg8[%c0_18, %c0_19] : memref<128x64xbf16, #tpu.memory_space<vmem>>, vector<128x64xbf16>
    %cst_20 = arith.constant dense<0.000000e+00> : vector<112x64xf32>
    %30 = tpu.matmul %28, %29, %cst_20 {dimension_numbers = #tpu.dot_dimension_numbers<[1], [0], [0], [1], [0, 0, 1, 1], [], []>} : vector<112x128xbf16>, vector<128x64xbf16>, vector<112x64xf32> -> vector<112x64xf32>
    %c0_21 = arith.constant 0 : index
    %c0_22 = arith.constant 0 : index
    %31 = vector.load %arg9[%c0_21, %c0_22] : memref<1x64xf32, #tpu.memory_space<vmem>>, vector<1x64xf32>
    %32 = vector.broadcast %31 : vector<1x64xf32> to vector<112x64xf32>
    %33 = arith.addf %30, %32 : vector<112x64xf32>
    %cst_23 = arith.constant 0.000000e+00 : f32
    %34 = vector.broadcast %cst_23 : f32 to vector<112x64xf32>
    %35 = arith.maximumf %33, %34 : vector<112x64xf32>
    %36 = arith.truncf %35 : vector<112x64xf32> to vector<112x64xbf16>
    %c0_24 = arith.constant 0 : index
    %c0_25 = arith.constant 0 : index
    %37 = vector.load %arg10[%c0_24, %c0_25] : memref<64x128xbf16, #tpu.memory_space<vmem>>, vector<64x128xbf16>
    %cst_26 = arith.constant dense<0.000000e+00> : vector<112x128xf32>
    %38 = tpu.matmul %36, %37, %cst_26 {dimension_numbers = #tpu.dot_dimension_numbers<[1], [0], [0], [1], [0, 0, 1, 1], [], []>} : vector<112x64xbf16>, vector<64x128xbf16>, vector<112x128xf32> -> vector<112x128xf32>
    %c0_27 = arith.constant 0 : index
    %c0_28 = arith.constant 0 : index
    %39 = vector.load %arg11[%c0_27, %c0_28] : memref<1x128xf32, #tpu.memory_space<vmem>>, vector<1x128xf32>
    %40 = vector.broadcast %39 : vector<1x128xf32> to vector<112x128xf32>
    %41 = arith.addf %38, %40 : vector<112x128xf32>
    %cst_29 = arith.constant 0.000000e+00 : f32
    %42 = vector.broadcast %cst_29 : f32 to vector<112x128xf32>
    %43 = arith.maximumf %41, %42 : vector<112x128xf32>
    %44 = arith.truncf %43 : vector<112x128xf32> to vector<112x128xbf16>
    %c0_30 = arith.constant 0 : index
    %c0_31 = arith.constant 0 : index
    %45 = vector.load %arg12[%c0_30, %c0_31] : memref<128x32xbf16, #tpu.memory_space<vmem>>, vector<128x32xbf16>
    %cst_32 = arith.constant dense<0.000000e+00> : vector<112x32xf32>
    %46 = tpu.matmul %44, %45, %cst_32 {dimension_numbers = #tpu.dot_dimension_numbers<[1], [0], [0], [1], [0, 0, 1, 1], [], []>} : vector<112x128xbf16>, vector<128x32xbf16>, vector<112x32xf32> -> vector<112x32xf32>
    %c0_33 = arith.constant 0 : index
    %c0_34 = arith.constant 0 : index
    %47 = vector.load %arg13[%c0_33, %c0_34] : memref<1x32xf32, #tpu.memory_space<vmem>>, vector<1x32xf32>
    %48 = vector.broadcast %47 : vector<1x32xf32> to vector<112x32xf32>
    %49 = arith.addf %46, %48 : vector<112x32xf32>
    %c0_35 = arith.constant 0 : index
    %c0_36 = arith.constant 0 : index
    %50 = vector.load %arg14[%c0_35, %c0_36] : memref<112x32xf32, #tpu.memory_space<vmem>>, vector<112x32xf32>
    tpu.vector_store %arg14[%c0_35, %c0_36], %49 {strides = array<i32>} : memref<112x32xf32, #tpu.memory_space<vmem>>, vector<112x32xf32>,
    return
  }
  func.func @transform_0(%arg0: i32) -> (i32, i32) {
    %c0_i32 = arith.constant 0 : i32
    %c0_i32_0 = arith.constant 0 : i32
    return %arg0, %c0_i32 : i32, i32
  }
  func.func @transform_1(%arg0: i32) -> (i32, i32) {
    %c0_i32 = arith.constant 0 : i32
    %c0_i32_0 = arith.constant 0 : i32
    %c0_i32_1 = arith.constant 0 : i32
    return %c0_i32, %c0_i32_0 : i32, i32
  }
  func.func @transform_2(%arg0: i32) -> (i32, i32) {
    %c0_i32 = arith.constant 0 : i32
    %c0_i32_0 = arith.constant 0 : i32
    %c0_i32_1 = arith.constant 0 : i32
    return %c0_i32, %c0_i32_0 : i32, i32
  }
  func.func @transform_3(%arg0: i32) -> (i32, i32) {
    %c0_i32 = arith.constant 0 : i32
    %c0_i32_0 = arith.constant 0 : i32
    %c0_i32_1 = arith.constant 0 : i32
    return %c0_i32, %c0_i32_0 : i32, i32
  }
  func.func @transform_4(%arg0: i32) -> (i32, i32) {
    %c0_i32 = arith.constant 0 : i32
    %c0_i32_0 = arith.constant 0 : i32
    %c0_i32_1 = arith.constant 0 : i32
    return %c0_i32, %c0_i32_0 : i32, i32
  }
  func.func @transform_5(%arg0: i32) -> (i32, i32) {
    %c0_i32 = arith.constant 0 : i32
    %c0_i32_0 = arith.constant 0 : i32
    %c0_i32_1 = arith.constant 0 : i32
    return %c0_i32, %c0_i32_0 : i32, i32
  }
  func.func @transform_6(%arg0: i32) -> (i32, i32) {
    %c0_i32 = arith.constant 0 : i32
    %c0_i32_0 = arith.constant 0 : i32
    %c0_i32_1 = arith.constant 0 : i32
    return %c0_i32, %c0_i32_0 : i32, i32
  }
  func.func @transform_7(%arg0: i32) -> (i32, i32) {
    %c0_i32 = arith.constant 0 : i32
    %c0_i32_0 = arith.constant 0 : i32
    %c0_i32_1 = arith.constant 0 : i32
    return %c0_i32, %c0_i32_0 : i32, i32
  }
  func.func @transform_8(%arg0: i32) -> (i32, i32) {
    %c0_i32 = arith.constant 0 : i32
    %c0_i32_0 = arith.constant 0 : i32
    %c0_i32_1 = arith.constant 0 : i32
    return %c0_i32, %c0_i32_0 : i32, i32
  }
  func.func @transform_9(%arg0: i32) -> (i32, i32) {
    %c0_i32 = arith.constant 0 : i32
    %c0_i32_0 = arith.constant 0 : i32
    %c0_i32_1 = arith.constant 0 : i32
    return %c0_i32, %c0_i32_0 : i32, i32
  }
  func.func @transform_10(%arg0: i32) -> (i32, i32) {
    %c0_i32 = arith.constant 0 : i32
    %c0_i32_0 = arith.constant 0 : i32
    %c0_i32_1 = arith.constant 0 : i32
    return %c0_i32, %c0_i32_0 : i32, i32
  }
  func.func @transform_11(%arg0: i32) -> (i32, i32) {
    %c0_i32 = arith.constant 0 : i32
    %c0_i32_0 = arith.constant 0 : i32
    %c0_i32_1 = arith.constant 0 : i32
    return %c0_i32, %c0_i32_0 : i32, i32
  }
  func.func @transform_12(%arg0: i32) -> (i32, i32) {
    %c0_i32 = arith.constant 0 : i32
    %c0_i32_0 = arith.constant 0 : i32
    %c0_i32_1 = arith.constant 0 : i32
    return %c0_i32, %c0_i32_0 : i32, i32
  }
  func.func @transform_13(%arg0: i32) -> (i32, i32) {
    %c0_i32 = arith.constant 0 : i32
    %c0_i32_0 = arith.constant 0 : i32
    return %arg0, %c0_i32 : i32, i32
  }
}

</mosaic_0001>

<llo_original>
// kernel: _lambda_.1
$region0: #{_lambda_.1}
  #allocation0 [shape = 'u32[]', space=smem, size = 0x4, offset = 0x4, fixed_abs, tag = 'smem constant byte address 0x4 - core index']
  #allocation1 [shape = 'u32[144,128]{1,0:T(1,128)}', space=vmem, size = 0x12000, scoped, tag = 'internal scratch']
  %s0 = inlined_call_operand.vmem [shape: f32[200,32], index: 0, kind: input, shape index: {}]
  %s1 = inlined_call_operand.vmem [shape: bf16[32,128], index: 1, kind: input, shape index: {}]
  %s2 = inlined_call_operand.vmem [shape: f32[1,128], index: 2, kind: input, shape index: {}]
  %s3 = inlined_call_operand.vmem [shape: bf16[128,64], index: 3, kind: input, shape index: {}]
  %s4 = inlined_call_operand.vmem [shape: f32[1,64], index: 4, kind: input, shape index: {}]
  %s5 = inlined_call_operand.vmem [shape: bf16[64,128], index: 5, kind: input, shape index: {}]
  %s6 = inlined_call_operand.vmem [shape: f32[1,128], index: 6, kind: input, shape index: {}]
  %s7 = inlined_call_operand.vmem [shape: bf16[128,64], index: 7, kind: input, shape index: {}]
  %s8 = inlined_call_operand.vmem [shape: f32[1,64], index: 8, kind: input, shape index: {}]
  %s9 = inlined_call_operand.vmem [shape: bf16[64,128], index: 9, kind: input, shape index: {}]
  %s10 = inlined_call_operand.vmem [shape: f32[1,128], index: 10, kind: input, shape index: {}]
  %s11 = inlined_call_operand.vmem [shape: bf16[128,32], index: 11, kind: input, shape index: {}]
  %s12 = inlined_call_operand.vmem [shape: f32[1,32], index: 12, kind: input, shape index: {}]
  %s13 = inlined_call_operand.vmem [shape: f32[200,32], index: 13, kind: output, shape index: {}]
  %s14 = sld [smem:[#allocation0]]
  $region133: #{_lambda_.1} parent=0
    _
  %s16 = ssub.s32 1, %s14
  %s17 = scalar_select 0, %s16, %s14
  $region1: #{_lambda_.1} parent=0
    #allocation2 [shape = 'u8[114688]{0}', space=vmem, size = 0x1c000, scoped, tag = 'output window, operand 0']
    loop: start=0, step=1, limit=4
    $region2: #{_lambda_.1} parent=1 // loop_pre_header
      _
    $region3: #{_lambda_.1} parent=1 // loop_header
      %s19 = sphi 0, %s23
      %p20 = scmp.ge.s32.totalorder %s19, 4
      %s29 = sphi 0, %s31
      %s32 = sphi 0, %s29
      %s33 = sphi 0, %s32
      %s49 = sphi 0, %s33
      %s53 = sphi 0, %s53
      %s55 = sphi 0, %s53
      %s56 = sphi 0, %s55
      %s70 = sphi 0, %s56
      %s74 = sphi 0, %s74
      %s76 = sphi 0, %s74
      %s77 = sphi 0, %s76
      %s91 = sphi 0, %s77
      %s95 = sphi 0, %s95
      %s97 = sphi 0, %s95
      %s98 = sphi 0, %s97
      %s112 = sphi 0, %s98
      %s116 = sphi 0, %s116
      %s118 = sphi 0, %s116
      %s119 = sphi 0, %s118
      %s133 = sphi 0, %s119
      %s137 = sphi 0, %s137
      %s139 = sphi 0, %s137
      %s140 = sphi 0, %s139
      %s154 = sphi 0, %s140
      %s158 = sphi 0, %s158
      %s160 = sphi 0, %s158
      %s161 = sphi 0, %s160
      %s175 = sphi 0, %s161
      %s179 = sphi 0, %s179
      %s181 = sphi 0, %s179
      %s182 = sphi 0, %s181
      %s196 = sphi 0, %s182
      %s200 = sphi 0, %s200
      %s202 = sphi 0, %s200
      %s203 = sphi 0, %s202
      %s217 = sphi 0, %s203
      %s221 = sphi 0, %s221
      %s223 = sphi 0, %s221
      %s224 = sphi 0, %s223
      %s238 = sphi 0, %s224
      %s242 = sphi 0, %s242
      %s244 = sphi 0, %s242
      %s245 = sphi 0, %s244
      %s259 = sphi 0, %s245
      %s263 = sphi 0, %s263
      %s265 = sphi 0, %s263
      %s266 = sphi 0, %s265
      %s280 = sphi 0, %s266
      %s284 = sphi 0, %s284
      %s286 = sphi 0, %s284
      %s287 = sphi 0, %s286
      %s301 = sphi 0, %s287
      %s307 = sphi 0, %s309
      %s310 = sphi 0, %s307
      %s311 = sphi 0, %s310
      %s327 = sphi 0, %s311
    $region4: #{_lambda_.1} parent=1 // loop_header_branch
      %22 = sbr.rel (%p20) target = $region8
    $region5: #{_lambda_.1} parent=1 // loop_body
      %s24 = ssub.s32 %s19, 1
      %s25 = ssub.s32 %s19, 2
      %s26 = sadd.s32 %s19, 1
      %s27 = ssub.s32 %s19, %s26
      %p28 = scmp.eq.s32.totalorder %s27, 0
      %s30 = sadd.s32 %s29, 1
      %s31 = scalar_select %p28, %s29, %s30
      %p34 = pneg %p28
      %p35 = scmp.eq.s32.totalorder %s19, 1
      %p36 = por %p34, %p35
      %p37 = scmp.ne.s32.totalorder %s29, %s32
      %p38 = scmp.eq.s32.totalorder %s19, 0
      %p39 = por %p37, %p38
      %p40 = scmp.ne.s32.totalorder %s29, %s32
      %p41 = scmp.eq.s32.totalorder %s24, 1
      %p42 = por %p40, %p41
      %p43 = scmp.ne.s32.totalorder %s32, %s33
      %p44 = scmp.eq.s32.totalorder %s24, 0
      %p45 = por %p43, %p44
      %p46 = scmp.ne.s32.totalorder %s32, %s33
      %p47 = scmp.eq.s32.totalorder %s25, 1
      %p48 = por %p46, %p47
      %p50 = scmp.ne.s32.totalorder %s33, %s49
      %p51 = scmp.eq.s32.totalorder %s25, 0
      %p52 = por %p50, %p51
      %s54 = sadd.s32 %s53, 1
      %p57 = scmp.eq.s32.totalorder %s19, 1
      %p58 = scmp.ne.s32.totalorder %s53, %s55
      %p59 = scmp.eq.s32.totalorder %s19, 0
      %p60 = por %p58, %p59
      %p61 = scmp.ne.s32.totalorder %s53, %s55
      %p62 = scmp.eq.s32.totalorder %s24, 1
      %p63 = por %p61, %p62
      %p64 = scmp.ne.s32.totalorder %s55, %s56
      %p65 = scmp.eq.s32.totalorder %s24, 0
      %p66 = por %p64, %p65
      %p67 = scmp.ne.s32.totalorder %s55, %s56
      %p68 = scmp.eq.s32.totalorder %s25, 1
      %p69 = por %p67, %p68
      %p71 = scmp.ne.s32.totalorder %s56, %s70
      %p72 = scmp.eq.s32.totalorder %s25, 0
      %p73 = por %p71, %p72
      %s75 = sadd.s32 %s74, 1
      %p78 = scmp.eq.s32.totalorder %s19, 1
      %p79 = scmp.ne.s32.totalorder %s74, %s76
      %p80 = scmp.eq.s32.totalorder %s19, 0
      %p81 = por %p79, %p80
      %p82 = scmp.ne.s32.totalorder %s74, %s76
      %p83 = scmp.eq.s32.totalorder %s24, 1
      %p84 = por %p82, %p83
      %p85 = scmp.ne.s32.totalorder %s76, %s77
      %p86 = scmp.eq.s32.totalorder %s24, 0
      %p87 = por %p85, %p86
      %p88 = scmp.ne.s32.totalorder %s76, %s77
      %p89 = scmp.eq.s32.totalorder %s25, 1
      %p90 = por %p88, %p89
      %p92 = scmp.ne.s32.totalorder %s77, %s91
      %p93 = scmp.eq.s32.totalorder %s25, 0
      %p94 = por %p92, %p93
      %s96 = sadd.s32 %s95, 1
      %p99 = scmp.eq.s32.totalorder %s19, 1
      %p100 = scmp.ne.s32.totalorder %s95, %s97
      %p101 = scmp.eq.s32.totalorder %s19, 0
      %p102 = por %p100, %p101
      %p103 = scmp.ne.s32.totalorder %s95, %s97
      %p104 = scmp.eq.s32.totalorder %s24, 1
      %p105 = por %p103, %p104
      %p106 = scmp.ne.s32.totalorder %s97, %s98
      %p107 = scmp.eq.s32.totalorder %s24, 0
      %p108 = por %p106, %p107
      %p109 = scmp.ne.s32.totalorder %s97, %s98
      %p110 = scmp.eq.s32.totalorder %s25, 1
      %p111 = por %p109, %p110
      %p113 = scmp.ne.s32.totalorder %s98, %s112
      %p114 = scmp.eq.s32.totalorder %s25, 0
      %p115 = por %p113, %p114
      %s117 = sadd.s32 %s116, 1
      %p120 = scmp.eq.s32.totalorder %s19, 1
      %p121 = scmp.ne.s32.totalorder %s116, %s118
      %p122 = scmp.eq.s32.totalorder %s19, 0
      %p123 = por %p121, %p122
      %p124 = scmp.ne.s32.totalorder %s116, %s118
      %p125 = scmp.eq.s32.totalorder %s24, 1
      %p126 = por %p124, %p125
      %p127 = scmp.ne.s32.totalorder %s118, %s119
      %p128 = scmp.eq.s32.totalorder %s24, 0
      %p129 = por %p127, %p128
      %p130 = scmp.ne.s32.totalorder %s118, %s119
      %p131 = scmp.eq.s32.totalorder %s25, 1
      %p132 = por %p130, %p131
      %p134 = scmp.ne.s32.totalorder %s119, %s133
      %p135 = scmp.eq.s32.totalorder %s25, 0
      %p136 = por %p134, %p135
      %s138 = sadd.s32 %s137, 1
      %p141 = scmp.eq.s32.totalorder %s19, 1
      %p142 = scmp.ne.s32.totalorder %s137, %s139
      %p143 = scmp.eq.s32.totalorder %s19, 0
      %p144 = por %p142, %p143
      %p145 = scmp.ne.s32.totalorder %s137, %s139
      %p146 = scmp.eq.s32.totalorder %s24, 1
      %p147 = por %p145, %p146
      %p148 = scmp.ne.s32.totalorder %s139, %s140
      %p149 = scmp.eq.s32.totalorder %s24, 0
      %p150 = por %p148, %p149
      %p151 = scmp.ne.s32.totalorder %s139, %s140
      %p152 = scmp.eq.s32.totalorder %s25, 1
      %p153 = por %p151, %p152
      %p155 = scmp.ne.s32.totalorder %s140, %s154
      %p156 = scmp.eq.s32.totalorder %s25, 0
      %p157 = por %p155, %p156
      %s159 = sadd.s32 %s158, 1
      %p162 = scmp.eq.s32.totalorder %s19, 1
      %p163 = scmp.ne.s32.totalorder %s158, %s160
      %p164 = scmp.eq.s32.totalorder %s19, 0
      %p165 = por %p163, %p164
      %p166 = scmp.ne.s32.totalorder %s158, %s160
      %p167 = scmp.eq.s32.totalorder %s24, 1
      %p168 = por %p166, %p167
      %p169 = scmp.ne.s32.totalorder %s160, %s161
      %p170 = scmp.eq.s32.totalorder %s24, 0
      %p171 = por %p169, %p170
      %p172 = scmp.ne.s32.totalorder %s160, %s161
      %p173 = scmp.eq.s32.totalorder %s25, 1
      %p174 = por %p172, %p173
      %p176 = scmp.ne.s32.totalorder %s161, %s175
      %p177 = scmp.eq.s32.totalorder %s25, 0
      %p178 = por %p176, %p177
      %s180 = sadd.s32 %s179, 1
      %p183 = scmp.eq.s32.totalorder %s19, 1
      %p184 = scmp.ne.s32.totalorder %s179, %s181
      %p185 = scmp.eq.s32.totalorder %s19, 0
      %p186 = por %p184, %p185
      %p187 = scmp.ne.s32.totalorder %s179, %s181
      %p188 = scmp.eq.s32.totalorder %s24, 1
      %p189 = por %p187, %p188
      %p190 = scmp.ne.s32.totalorder %s181, %s182
      %p191 = scmp.eq.s32.totalorder %s24, 0
      %p192 = por %p190, %p191
      %p193 = scmp.ne.s32.totalorder %s181, %s182
      %p194 = scmp.eq.s32.totalorder %s25, 1
      %p195 = por %p193, %p194
      %p197 = scmp.ne.s32.totalorder %s182, %s196
      %p198 = scmp.eq.s32.totalorder %s25, 0
      %p199 = por %p197, %p198
      %s201 = sadd.s32 %s200, 1
      %p204 = scmp.eq.s32.totalorder %s19, 1
      %p205 = scmp.ne.s32.totalorder %s200, %s202
      %p206 = scmp.eq.s32.totalorder %s19, 0
      %p207 = por %p205, %p206
      %p208 = scmp.ne.s32.totalorder %s200, %s202
      %p209 = scmp.eq.s32.totalorder %s24, 1
      %p210 = por %p208, %p209
      %p211 = scmp.ne.s32.totalorder %s202, %s203
      %p212 = scmp.eq.s32.totalorder %s24, 0
      %p213 = por %p211, %p212
      %p214 = scmp.ne.s32.totalorder %s202, %s203
      %p215 = scmp.eq.s32.totalorder %s25, 1
      %p216 = por %p214, %p215
      %p218 = scmp.ne.s32.totalorder %s203, %s217
      %p219 = scmp.eq.s32.totalorder %s25, 0
      %p220 = por %p218, %p219
      %s222 = sadd.s32 %s221, 1
      %p225 = scmp.eq.s32.totalorder %s19, 1
      %p226 = scmp.ne.s32.totalorder %s221, %s223
      %p227 = scmp.eq.s32.totalorder %s19, 0
      %p228 = por %p226, %p227
      %p229 = scmp.ne.s32.totalorder %s221, %s223
      %p230 = scmp.eq.s32.totalorder %s24, 1
      %p231 = por %p229, %p230
      %p232 = scmp.ne.s32.totalorder %s223, %s224
      %p233 = scmp.eq.s32.totalorder %s24, 0
      %p234 = por %p232, %p233
      %p235 = scmp.ne.s32.totalorder %s223, %s224
      %p236 = scmp.eq.s32.totalorder %s25, 1
      %p237 = por %p235, %p236
      %p239 = scmp.ne.s32.totalorder %s224, %s238
      %p240 = scmp.eq.s32.totalorder %s25, 0
      %p241 = por %p239, %p240
      %s243 = sadd.s32 %s242, 1
      %p246 = scmp.eq.s32.totalorder %s19, 1
      %p247 = scmp.ne.s32.totalorder %s242, %s244
      %p248 = scmp.eq.s32.totalorder %s19, 0
      %p249 = por %p247, %p248
      %p250 = scmp.ne.s32.totalorder %s242, %s244
      %p251 = scmp.eq.s32.totalorder %s24, 1
      %p252 = por %p250, %p251
      %p253 = scmp.ne.s32.totalorder %s244, %s245
      %p254 = scmp.eq.s32.totalorder %s24, 0
      %p255 = por %p253, %p254
      %p256 = scmp.ne.s32.totalorder %s244, %s245
      %p257 = scmp.eq.s32.totalorder %s25, 1
      %p258 = por %p256, %p257
      %p260 = scmp.ne.s32.totalorder %s245, %s259
      %p261 = scmp.eq.s32.totalorder %s25, 0
      %p262 = por %p260, %p261
      %s264 = sadd.s32 %s263, 1
      %p267 = scmp.eq.s32.totalorder %s19, 1
      %p268 = scmp.ne.s32.totalorder %s263, %s265
      %p269 = scmp.eq.s32.totalorder %s19, 0
      %p270 = por %p268, %p269
      %p271 = scmp.ne.s32.totalorder %s263, %s265
      %p272 = scmp.eq.s32.totalorder %s24, 1
      %p273 = por %p271, %p272
      %p274 = scmp.ne.s32.totalorder %s265, %s266
      %p275 = scmp.eq.s32.totalorder %s24, 0
      %p276 = por %p274, %p275
      %p277 = scmp.ne.s32.totalorder %s265, %s266
      %p278 = scmp.eq.s32.totalorder %s25, 1
      %p279 = por %p277, %p278
      %p281 = scmp.ne.s32.totalorder %s266, %s280
      %p282 = scmp.eq.s32.totalorder %s25, 0
      %p283 = por %p281, %p282
      %s285 = sadd.s32 %s284, 1
      %p288 = scmp.eq.s32.totalorder %s19, 1
      %p289 = scmp.ne.s32.totalorder %s284, %s286
      %p290 = scmp.eq.s32.totalorder %s19, 0
      %p291 = por %p289, %p290
      %p292 = scmp.ne.s32.totalorder %s284, %s286
      %p293 = scmp.eq.s32.totalorder %s24, 1
      %p294 = por %p292, %p293
      %p295 = scmp.ne.s32.totalorder %s286, %s287
      %p296 = scmp.eq.s32.totalorder %s24, 0
      %p297 = por %p295, %p296
      %p298 = scmp.ne.s32.totalorder %s286, %s287
      %p299 = scmp.eq.s32.totalorder %s25, 1
      %p300 = por %p298, %p299
      %p302 = scmp.ne.s32.totalorder %s287, %s301
      %p303 = scmp.eq.s32.totalorder %s25, 0
      %p304 = por %p302, %p303
      %s305 = ssub.s32 %s19, %s26
      %p306 = scmp.eq.s32.totalorder %s305, 0
      %s308 = sadd.s32 %s307, 1
      %s309 = scalar_select %p306, %s307, %s308
      %p312 = pneg %p306
      %p313 = scmp.eq.s32.totalorder %s19, 1
      %p314 = por %p312, %p313
      %p315 = scmp.ne.s32.totalorder %s307, %s310
      %p316 = scmp.eq.s32.totalorder %s19, 0
      %p317 = por %p315, %p316
      %p318 = scmp.ne.s32.totalorder %s307, %s310
      %p319 = scmp.eq.s32.totalorder %s24, 1
      %p320 = por %p318, %p319
      %p321 = scmp.ne.s32.totalorder %s310, %s311
      %p322 = scmp.eq.s32.totalorder %s24, 0
      %p323 = por %p321, %p322
      %p324 = scmp.ne.s32.totalorder %s310, %s311
      %p325 = scmp.eq.s32.totalorder %s25, 1
      %p326 = por %p324, %p325
      %p328 = scmp.ne.s32.totalorder %s311, %s327
      %p329 = scmp.eq.s32.totalorder %s25, 0
      %p330 = por %p328, %p329
      %p331 = scmp.le.s32.totalorder 1, %s19
      %p332 = scmp.lt.s32.totalorder %s19, 3
      %p333 = pnand %p331, %p332
      %p334 = pneg %p333
      // Predicated region
      $region9: #{_lambda_.1} parent=5 // pred_check
        _
      $region10: #{_lambda_.1} parent=5 // pred_check_branch
        %336 = sbr.rel (%p333) target = $region12
      $region11: #{_lambda_.1} parent=5 // pred_region
        %s337 = ssub.s32 %s19, 1
        // Predicated region
        $region13: #{_lambda_.1} parent=11 // pred_check
          %p338 = pneg %p66
        $region14: #{_lambda_.1} parent=11 // pred_check_branch
          %340 = sbr.rel (%p338) target = $region16
        $region15: #{_lambda_.1} parent=11 // pred_region
          _
        $region16: #{_lambda_.1} parent=11 // pred_fallthru
          _
        // Predicated region
        $region17: #{_lambda_.1} parent=11 // pred_check
          %p341 = pneg %p87
        $region18: #{_lambda_.1} parent=11 // pred_check_branch
          %343 = sbr.rel (%p341) target = $region20
        $region19: #{_lambda_.1} parent=11 // pred_region
          _
        $region20: #{_lambda_.1} parent=11 // pred_fallthru
          _
        // Predicated region
        $region21: #{_lambda_.1} parent=11 // pred_check
          %p344 = pneg %p108
        $region22: #{_lambda_.1} parent=11 // pred_check_branch
          %346 = sbr.rel (%p344) target = $region24
        $region23: #{_lambda_.1} parent=11 // pred_region
          _
        $region24: #{_lambda_.1} parent=11 // pred_fallthru
          _
        // Predicated region
        $region25: #{_lambda_.1} parent=11 // pred_check
          %p347 = pneg %p129
        $region26: #{_lambda_.1} parent=11 // pred_check_branch
          %349 = sbr.rel (%p347) target = $region28
        $region27: #{_lambda_.1} parent=11 // pred_region
          _
        $region28: #{_lambda_.1} parent=11 // pred_fallthru
          _
        // Predicated region
        $region29: #{_lambda_.1} parent=11 // pred_check
          %p350 = pneg %p150
        $region30: #{_lambda_.1} parent=11 // pred_check_branch
          %352 = sbr.rel (%p350) target = $region32
        $region31: #{_lambda_.1} parent=11 // pred_region
          _
        $region32: #{_lambda_.1} parent=11 // pred_fallthru
          _
        // Predicated region
        $region33: #{_lambda_.1} parent=11 // pred_check
          %p353 = pneg %p171
        $region34: #{_lambda_.1} parent=11 // pred_check_branch
          %355 = sbr.rel (%p353) target = $region36
        $region35: #{_lambda_.1} parent=11 // pred_region
          _
        $region36: #{_lambda_.1} parent=11 // pred_fallthru
          _
        // Predicated region
        $region37: #{_lambda_.1} parent=11 // pred_check
          %p356 = pneg %p192
        $region38: #{_lambda_.1} parent=11 // pred_check_branch
          %358 = sbr.rel (%p356) target = $region40
        $region39: #{_lambda_.1} parent=11 // pred_region
          _
        $region40: #{_lambda_.1} parent=11 // pred_fallthru
          _
        // Predicated region
        $region41: #{_lambda_.1} parent=11 // pred_check
          %p359 = pneg %p213
        $region42: #{_lambda_.1} parent=11 // pred_check_branch
          %361 = sbr.rel (%p359) target = $region44
        $region43: #{_lambda_.1} parent=11 // pred_region
          _
        $region44: #{_lambda_.1} parent=11 // pred_fallthru
          _
        // Predicated region
        $region45: #{_lambda_.1} parent=11 // pred_check
          %p362 = pneg %p234
        $region46: #{_lambda_.1} parent=11 // pred_check_branch
          %364 = sbr.rel (%p362) target = $region48
        $region47: #{_lambda_.1} parent=11 // pred_region
          _
        $region48: #{_lambda_.1} parent=11 // pred_fallthru
          _
        // Predicated region
        $region49: #{_lambda_.1} parent=11 // pred_check
          %p365 = pneg %p255
        $region50: #{_lambda_.1} parent=11 // pred_check_branch
          %367 = sbr.rel (%p365) target = $region52
        $region51: #{_lambda_.1} parent=11 // pred_region
          _
        $region52: #{_lambda_.1} parent=11 // pred_fallthru
          _
        // Predicated region
        $region53: #{_lambda_.1} parent=11 // pred_check
          %p368 = pneg %p276
        $region54: #{_lambda_.1} parent=11 // pred_check_branch
          %370 = sbr.rel (%p368) target = $region56
        $region55: #{_lambda_.1} parent=11 // pred_region
          _
        $region56: #{_lambda_.1} parent=11 // pred_fallthru
          _
        // Predicated region
        $region57: #{_lambda_.1} parent=11 // pred_check
          %p371 = pneg %p297
        $region58: #{_lambda_.1} parent=11 // pred_check_branch
          %373 = sbr.rel (%p371) target = $region60
        $region59: #{_lambda_.1} parent=11 // pred_region
          _
        $region60: #{_lambda_.1} parent=11 // pred_fallthru
          _
      $region12: #{_lambda_.1} parent=5 // pred_fallthru
        _
      %p374 = scmp.lt.s32.totalorder %s19, 2
      // Predicated region
      $region61: #{_lambda_.1} parent=5 // pred_check
        %p375 = pneg %p374
      $region62: #{_lambda_.1} parent=5 // pred_check_branch
        %377 = sbr.rel (%p375) target = $region64
      $region63: #{_lambda_.1} parent=5 // pred_region
        // Predicated region
        $region65: #{_lambda_.1} parent=63 // pred_check
          %p378 = pneg %p39
        $region66: #{_lambda_.1} parent=63 // pred_check_branch
          %380 = sbr.rel (%p378) target = $region68
        $region67: #{_lambda_.1} parent=63 // pred_region
          %s381 = smul.u32 14, %s19
          %s382 = ssub.s32 25, %s381
          %p383 = scmp.lt.s32.totalorder %s382, 14
          %s384 = scalar_select %p383, %s382, 14
          %s385 = smul.u32 128, %s384
          %p386 = scmp.lt.s32.totalorder %s381, 24
          %s387 = scalar_select %p386, %s381, 24
          %s388 = smul.addr %s387, 8
          %s389 = scalar_lea.vmem %s0, %s388
          %s390 = smul.u32 14, %s19
          %s391 = ssub.s32 25, %s390
          %p392 = scmp.lt.s32.totalorder %s391, 14
          %s393 = scalar_select %p392, %s391, 14
          %s394 = smul.u32 128, %s393
        $region68: #{_lambda_.1} parent=63 // pred_fallthru
          _
      $region64: #{_lambda_.1} parent=5 // pred_fallthru
        _
      %p395 = scmp.le.s32.totalorder 1, %s19
      %p396 = scmp.lt.s32.totalorder %s19, 3
      %p397 = pnand %p395, %p396
      %p398 = pneg %p397
      // Predicated region
      $region69: #{_lambda_.1} parent=5 // pred_check
        _
      $region70: #{_lambda_.1} parent=5 // pred_check_branch
        %400 = sbr.rel (%p397) target = $region72
      $region71: #{_lambda_.1} parent=5 // pred_region
        %s401 = ssub.s32 %s19, 1
        %s402 = smul.u32 14, %s24
        %s403 = ssub.s32 25, %s402
        %p404 = scmp.lt.s32.totalorder %s403, 14
        %s405 = scalar_select %p404, %s403, 14
        %s406 = smul.u32 128, %s405
        %p407 = scmp.lt.s32.totalorder %s402, 24
        %s408 = scalar_select %p407, %s402, 24
        %s409 = smul.addr %s408, 8
        %s410 = scalar_lea.vmem %s0, %s409
        %p411 = pneg %p45
        %p412 = pneg %p42
        %p413 = pneg %p66
        %p414 = pneg %p63
        %p415 = pneg %p87
        %p416 = pneg %p84
        %p417 = pneg %p108
        %p418 = pneg %p105
        %p419 = pneg %p129
        %p420 = pneg %p126
        %p421 = pneg %p150
        %p422 = pneg %p147
        %p423 = pneg %p171
        %p424 = pneg %p168
        %p425 = pneg %p192
        %p426 = pneg %p189
        %p427 = pneg %p213
        %p428 = pneg %p210
        %p429 = pneg %p234
        %p430 = pneg %p231
        %p431 = pneg %p255
        %p432 = pneg %p252
        %p433 = pneg %p276
        %p434 = pneg %p273
        %p435 = pneg %p297
        %p436 = pneg %p294
        %p437 = pneg %p323
        %p438 = pneg %p320
        %s439 = sand.u32 %s310, 1
        %s440 = sand.u32 %s310, 1
        %s441 = smul.addr %s440, 112
        %s442 = scalar_lea.vmem [#allocation2], %s441
        %s443 = smul.u32 14, %s24
        %s444 = ssub.s32 25, %s443
        %p445 = scmp.lt.s32.totalorder %s444, 14
        %s446 = scalar_select %p445, %s444, 14
        %s447 = smul.u32 128, %s446
        %p448 = scmp.lt.s32.totalorder %s443, 24
        %s449 = scalar_select %p448, %s443, 24
        %s450 = smul.addr %s449, 8
        %s451 = scalar_lea.vmem %s0, %s450
        %s452 = smul.u32 14, %s24
        %s453 = ssub.s32 25, %s452
        %p454 = scmp.lt.s32.totalorder %s453, 14
        %s455 = scalar_select %p454, %s453, 14
        %s456 = smul.u32 128, %s455
        %s457 = smul.u32 14, %s24
        %s458 = ssub.s32 25, %s457
        %p459 = scmp.lt.s32.totalorder %s458, 14
        %s460 = scalar_select %p459, %s458, 14
        %s461 = smul.u32 128, %s460
        %v463 = vld [vmem:[%s451] sm:$0xff]
        %v464 = vld [vmem:[%s451 + $0x8] sm:$0xff]
        %v465 = vld [vmem:[%s451 + $0x10] sm:$0xff]
        %v466 = vld [vmem:[%s451 + $0x18] sm:$0xff]
        %v467 = vld [vmem:[%s451 + $0x20] sm:$0xff]
        %v468 = vld [vmem:[%s451 + $0x28] sm:$0xff]
        %v469 = vld [vmem:[%s451 + $0x30] sm:$0xff]
        %v470 = vld [vmem:[%s451 + $0x38] sm:$0xff]
        %v471 = vld [vmem:[%s451 + $0x40] sm:$0xff]
        %v472 = vld [vmem:[%s451 + $0x48] sm:$0xff]
        %v473 = vld [vmem:[%s451 + $0x50] sm:$0xff]
        %v474 = vld [vmem:[%s451 + $0x58] sm:$0xff]
        %v475 = vld [vmem:[%s451 + $0x60] sm:$0xff]
        %v476 = vld [vmem:[%s451 + $0x68] sm:$0xff]
        %v477 = vpack.c.bf16 %v464, %v463
        %v478 = vpack.c.bf16 %v466, %v465
        %v479 = vpack.c.bf16 %v468, %v467
        %v480 = vpack.c.bf16 %v470, %v469
        %v481 = vpack.c.bf16 %v472, %v471
        %v482 = vpack.c.bf16 %v474, %v473
        %v483 = vpack.c.bf16 %v476, %v475
        %v484 = vld [vmem:[%s1] sm:$0xf]
        %v485 = vld [vmem:[%s1 + $0x4] sm:$0xf]
        %v486 = vld [vmem:[%s1 + $0x8] sm:$0xf]
        %v487 = vld [vmem:[%s1 + $0xc] sm:$0xf]
        %v488 = vld [vmem:[%s2] sm:$0x1]
        %v490 = vlaneseq
        %v491 = vshrl.u32 %v490, 7
        %v492 = vsub.s32 0, %v491
        %v493 = vrot.slane %v488, %v492
        %v499 = vunpack.c.l.b16 %v484
        %v500 = vunpack.c.l.b16 %v485
        %v501 = vunpack.c.l.b16 %v486
        %v502 = vunpack.c.l.b16 %v487
        %v503 = vpack.c.b16 %v500, %v499
        %v504 = vpack.c.b16 %v502, %v501
        %vm507 = vcmask 261120
        %v509 = vsel %vm507, %v477, 0
        %v512 = vsel %vm507, %v478, 0
        %v515 = vsel %vm507, %v479, 0
        %v518 = vsel %vm507, %v480, 0
        %v521 = vsel %vm507, %v481, 0
        %v524 = vsel %vm507, %v482, 0
        %v527 = vsel %vm507, %v483, 0
        %529 = vmatprep.subr.bf16.mxu0 0
        %530 = vmatpush1.bf16.msra.mxu0 %v503
        %531 = vmatprep.subr.bf16.mxu0 0
        %532 = vmatpush1.bf16.msra.mxu0 %v504
        %533 = vmatprep.subr.bf16.mxu0 0
        %534 = vmatpush1.bf16.msra.mxu0 0
        %535 = vmatprep.subr.bf16.mxu0 0
        %536 = vmatpush1.bf16.msra.mxu0 0
        %537 = vmatprep.subr.bf16.mxu0 0
        %538 = vmatpush1.bf16.msra.mxu0 0
        %539 = vmatprep.subr.bf16.mxu0 0
        %540 = vmatpush1.bf16.msra.mxu0 0
        %541 = vmatprep.subr.bf16.mxu0 0
        %542 = vmatpush1.bf16.msra.mxu0 0
        %543 = vmatprep.subr.bf16.mxu0 0
        %544 = vmatpush1.bf16.msra.mxu0 0
        %545 = vmatprep.subr.bf16.mxu0 0
        %546 = vmatpush1.bf16.msra.mxu0 0
        %547 = vmatprep.subr.bf16.mxu0 0
        %548 = vmatpush1.bf16.msra.mxu0 0
        %549 = vmatprep.subr.bf16.mxu0 0
        %550 = vmatpush1.bf16.msra.mxu0 0
        %551 = vmatprep.subr.bf16.mxu0 0
        %552 = vmatpush1.bf16.msra.mxu0 0
        %553 = vmatprep.subr.bf16.mxu0 0
        %554 = vmatpush1.bf16.msra.mxu0 0
        %555 = vmatprep.subr.bf16.mxu0 0
        %556 = vmatpush1.bf16.msra.mxu0 0
        %557 = vmatprep.subr.bf16.mxu0 0
        %558 = vmatpush1.bf16.msra.mxu0 0
        %559 = vmatprep.subr.bf16.mxu0 0
        %560 = vmatpush1.bf16.msra.mxu0 0
        %561 = vmatprep.mubr.bf16.mxu0 0
        %562 = vmatmul.mubr.bf16.gmra.mrb[0].mxu0 %v509
        %v563 = vpop.f32.mrb[0].mxu0
        %v564 = vadd.f32 %v493, %v563
        %v565 = vpop.f32.mrb[0].mxu0
        %v566 = vpop.f32.mrb[0].mxu0
        %v567 = vadd.f32 %v493, %v566
        %v568 = vpop.f32.mrb[0].mxu0
        %569 = vmatprep.mubr.bf16.mxu0 0
        %570 = vmatmul.mubr.bf16.gmra.mrb[0].mxu0 %v512
        %v571 = vpop.f32.mrb[0].mxu0
        %v572 = vadd.f32 %v493, %v571
        %v573 = vpop.f32.mrb[0].mxu0
        %v574 = vpop.f32.mrb[0].mxu0
        %v575 = vadd.f32 %v493, %v574
        %v576 = vpop.f32.mrb[0].mxu0
        %577 = vmatprep.mubr.bf16.mxu0 0
        %578 = vmatmul.mubr.bf16.gmra.mrb[0].mxu0 %v515
        %v579 = vpop.f32.mrb[0].mxu0
        %v580 = vadd.f32 %v493, %v579
        %v581 = vpop.f32.mrb[0].mxu0
        %v582 = vpop.f32.mrb[0].mxu0
        %v583 = vadd.f32 %v493, %v582
        %v584 = vpop.f32.mrb[0].mxu0
        %585 = vmatprep.mubr.bf16.mxu0 0
        %586 = vmatmul.mubr.bf16.gmra.mrb[0].mxu0 %v518
        %v587 = vpop.f32.mrb[0].mxu0
        %v588 = vadd.f32 %v493, %v587
        %v589 = vpop.f32.mrb[0].mxu0
        %v590 = vpop.f32.mrb[0].mxu0
        %v591 = vadd.f32 %v493, %v590
        %v592 = vpop.f32.mrb[0].mxu0
        %593 = vmatprep.mubr.bf16.mxu0 0
        %594 = vmatmul.mubr.bf16.gmra.mrb[0].mxu0 %v521
        %v595 = vpop.f32.mrb[0].mxu0
        %v596 = vadd.f32 %v493, %v595
        %v597 = vpop.f32.mrb[0].mxu0
        %v598 = vpop.f32.mrb[0].mxu0
        %v599 = vadd.f32 %v493, %v598
        %v600 = vpop.f32.mrb[0].mxu0
        %601 = vmatprep.mubr.bf16.mxu0 0
        %602 = vmatmul.mubr.bf16.gmra.mrb[0].mxu0 %v524
        %v603 = vpop.f32.mrb[0].mxu0
        %v604 = vadd.f32 %v493, %v603
        %v605 = vpop.f32.mrb[0].mxu0
        %v606 = vpop.f32.mrb[0].mxu0
        %v607 = vadd.f32 %v493, %v606
        %v608 = vpop.f32.mrb[0].mxu0
        %609 = vmatprep.mubr.bf16.mxu0 0
        %610 = vmatmul.mubr.bf16.gmra.mrb[0].mxu0 %v527
        %v611 = vpop.f32.mrb[0].mxu0
        %v612 = vadd.f32 %v493, %v611
        %v613 = vpop.f32.mrb[0].mxu0
        %v614 = vpop.f32.mrb[0].mxu0
        %v615 = vadd.f32 %v493, %v614
        %v616 = vpop.f32.mrb[0].mxu0
        %617 = vdwg.mxu0
        %v618 = vmax.f32 %v564, 0.0
        %v619 = vmax.f32 %v567, 0.0
        %v620 = vmax.f32 %v572, 0.0
        %v621 = vmax.f32 %v575, 0.0
        %v622 = vmax.f32 %v580, 0.0
        %v623 = vmax.f32 %v583, 0.0
        %v624 = vmax.f32 %v588, 0.0
        %v625 = vmax.f32 %v591, 0.0
        %v626 = vmax.f32 %v596, 0.0
        %v627 = vmax.f32 %v599, 0.0
        %v628 = vmax.f32 %v604, 0.0
        %v629 = vmax.f32 %v607, 0.0
        %v630 = vmax.f32 %v612, 0.0
        %v631 = vmax.f32 %v615, 0.0
        %v632 = vpack.c.bf16 %v619, %v618
        %v633 = vpack.c.bf16 %v621, %v620
        %v634 = vpack.c.bf16 %v623, %v622
        %v635 = vpack.c.bf16 %v625, %v624
        %v636 = vpack.c.bf16 %v627, %v626
        %v637 = vpack.c.bf16 %v629, %v628
        %v638 = vpack.c.bf16 %v631, %v630
        %v639 = vld [vmem:[%s3] sm:$0xf]
        %v640 = vld [vmem:[%s3 + $0x4] sm:$0xf]
        %v641 = vld [vmem:[%s3 + $0x8] sm:$0xf]
        %v642 = vld [vmem:[%s3 + $0xc] sm:$0xf]
        %v643 = vld [vmem:[%s3 + $0x10] sm:$0xf]
        %v644 = vld [vmem:[%s3 + $0x14] sm:$0xf]
        %v645 = vld [vmem:[%s3 + $0x18] sm:$0xf]
        %v646 = vld [vmem:[%s3 + $0x1c] sm:$0xf]
        %v647 = vld [vmem:[%s3 + $0x20] sm:$0xf]
        %v648 = vld [vmem:[%s3 + $0x24] sm:$0xf]
        %v649 = vld [vmem:[%s3 + $0x28] sm:$0xf]
        %v650 = vld [vmem:[%s3 + $0x2c] sm:$0xf]
        %v651 = vld [vmem:[%s3 + $0x30] sm:$0xf]
        %v652 = vld [vmem:[%s3 + $0x34] sm:$0xf]
        %v653 = vld [vmem:[%s3 + $0x38] sm:$0xf]
        %v654 = vld [vmem:[%s3 + $0x3c] sm:$0xf]
        %v655 = vld [vmem:[%s4] sm:$0x1]
        %v657 = vlaneseq
        %v658 = vshrl.u32 %v657, 7
        %v659 = vsub.s32 0, %v658
        %v660 = vrot.slane %v655, %v659
        %v678 = vunpack.c.l.b16 %v639
        %v679 = vunpack.c.l.b16 %v640
        %v680 = vunpack.c.l.b16 %v641
        %v681 = vunpack.c.l.b16 %v642
        %v682 = vunpack.c.l.b16 %v643
        %v683 = vunpack.c.l.b16 %v644
        %v684 = vunpack.c.l.b16 %v645
        %v685 = vunpack.c.l.b16 %v646
        %v686 = vunpack.c.l.b16 %v647
        %v687 = vunpack.c.l.b16 %v648
        %v688 = vunpack.c.l.b16 %v649
        %v689 = vunpack.c.l.b16 %v650
        %v690 = vunpack.c.l.b16 %v651
        %v691 = vunpack.c.l.b16 %v652
        %v692 = vunpack.c.l.b16 %v653
        %v693 = vunpack.c.l.b16 %v654
        %v694 = vpack.c.b16 %v679, %v678
        %v695 = vpack.c.b16 %v681, %v680
        %v696 = vpack.c.b16 %v683, %v682
        %v697 = vpack.c.b16 %v685, %v684
        %v698 = vpack.c.b16 %v687, %v686
        %v699 = vpack.c.b16 %v689, %v688
        %v700 = vpack.c.b16 %v691, %v690
        %v701 = vpack.c.b16 %v693, %v692
        %710 = vmatprep.subr.bf16.mxu0 0
        %711 = vmatpush1.bf16.msra.mxu0 %v694
        %712 = vmatprep.subr.bf16.mxu0 0
        %713 = vmatpush1.bf16.msra.mxu0 %v695
        %714 = vmatprep.subr.bf16.mxu0 0
        %715 = vmatpush1.bf16.msra.mxu0 %v696
        %716 = vmatprep.subr.bf16.mxu0 0
        %717 = vmatpush1.bf16.msra.mxu0 %v697
        %718 = vmatprep.subr.bf16.mxu0 0
        %719 = vmatpush1.bf16.msra.mxu0 %v698
        %720 = vmatprep.subr.bf16.mxu0 0
        %721 = vmatpush1.bf16.msra.mxu0 %v699
        %722 = vmatprep.subr.bf16.mxu0 0
        %723 = vmatpush1.bf16.msra.mxu0 %v700
        %724 = vmatprep.subr.bf16.mxu0 0
        %725 = vmatpush1.bf16.msra.mxu0 %v701
        %726 = vmatprep.subr.bf16.mxu0 0
        %727 = vmatpush1.bf16.msra.mxu0 0
        %728 = vmatprep.subr.bf16.mxu0 0
        %729 = vmatpush1.bf16.msra.mxu0 0
        %730 = vmatprep.subr.bf16.mxu0 0
        %731 = vmatpush1.bf16.msra.mxu0 0
        %732 = vmatprep.subr.bf16.mxu0 0
        %733 = vmatpush1.bf16.msra.mxu0 0
        %734 = vmatprep.subr.bf16.mxu0 0
        %735 = vmatpush1.bf16.msra.mxu0 0
        %736 = vmatprep.subr.bf16.mxu0 0
        %737 = vmatpush1.bf16.msra.mxu0 0
        %738 = vmatprep.subr.bf16.mxu0 0
        %739 = vmatpush1.bf16.msra.mxu0 0
        %740 = vmatprep.subr.bf16.mxu0 0
        %741 = vmatpush1.bf16.msra.mxu0 0
        %742 = vmatprep.mubr.bf16.mxu0 0
        %743 = vmatmul.mubr.bf16.gmra.mrb[0].mxu0 %v632
        %v744 = vpop.f32.mrb[0].mxu0
        %v745 = vadd.f32 %v660, %v744
        %v746 = vpop.f32.mrb[0].mxu0
        %v747 = vpop.f32.mrb[0].mxu0
        %v748 = vadd.f32 %v660, %v747
        %v749 = vpop.f32.mrb[0].mxu0
        %750 = vmatprep.mubr.bf16.mxu0 0
        %751 = vmatmul.mubr.bf16.gmra.mrb[0].mxu0 %v633
        %v752 = vpop.f32.mrb[0].mxu0
        %v753 = vadd.f32 %v660, %v752
        %v754 = vpop.f32.mrb[0].mxu0
        %v755 = vpop.f32.mrb[0].mxu0
        %v756 = vadd.f32 %v660, %v755
        %v757 = vpop.f32.mrb[0].mxu0
        %758 = vmatprep.mubr.bf16.mxu0 0
        %759 = vmatmul.mubr.bf16.gmra.mrb[0].mxu0 %v634
        %v760 = vpop.f32.mrb[0].mxu0
        %v761 = vadd.f32 %v660, %v760
        %v762 = vpop.f32.mrb[0].mxu0
        %v763 = vpop.f32.mrb[0].mxu0
        %v764 = vadd.f32 %v660, %v763
        %v765 = vpop.f32.mrb[0].mxu0
        %766 = vmatprep.mubr.bf16.mxu0 0
        %767 = vmatmul.mubr.bf16.gmra.mrb[0].mxu0 %v635
        %v768 = vpop.f32.mrb[0].mxu0
        %v769 = vadd.f32 %v660, %v768
        %v770 = vpop.f32.mrb[0].mxu0
        %v771 = vpop.f32.mrb[0].mxu0
        %v772 = vadd.f32 %v660, %v771
        %v773 = vpop.f32.mrb[0].mxu0
        %774 = vmatprep.mubr.bf16.mxu0 0
        %775 = vmatmul.mubr.bf16.gmra.mrb[0].mxu0 %v636
        %v776 = vpop.f32.mrb[0].mxu0
        %v777 = vadd.f32 %v660, %v776
        %v778 = vpop.f32.mrb[0].mxu0
        %v779 = vpop.f32.mrb[0].mxu0
        %v780 = vadd.f32 %v660, %v779
        %v781 = vpop.f32.mrb[0].mxu0
        %782 = vmatprep.mubr.bf16.mxu0 0
        %783 = vmatmul.mubr.bf16.gmra.mrb[0].mxu0 %v637
        %v784 = vpop.f32.mrb[0].mxu0
        %v785 = vadd.f32 %v660, %v784
        %v786 = vpop.f32.mrb[0].mxu0
        %v787 = vpop.f32.mrb[0].mxu0
        %v788 = vadd.f32 %v660, %v787
        %v789 = vpop.f32.mrb[0].mxu0
        %790 = vmatprep.mubr.bf16.mxu0 0
        %791 = vmatmul.mubr.bf16.gmra.mrb[0].mxu0 %v638
        %v792 = vpop.f32.mrb[0].mxu0
        %v793 = vadd.f32 %v660, %v792
        %v794 = vpop.f32.mrb[0].mxu0
        %v795 = vpop.f32.mrb[0].mxu0
        %v796 = vadd.f32 %v660, %v795
        %v797 = vpop.f32.mrb[0].mxu0
        %798 = vdwg.mxu0
        %v799 = vmax.f32 %v745, 0.0
        %v800 = vmax.f32 %v748, 0.0
        %v801 = vmax.f32 %v753, 0.0
        %v802 = vmax.f32 %v756, 0.0
        %v803 = vmax.f32 %v761, 0.0
        %v804 = vmax.f32 %v764, 0.0
        %v805 = vmax.f32 %v769, 0.0
        %v806 = vmax.f32 %v772, 0.0
        %v807 = vmax.f32 %v777, 0.0
        %v808 = vmax.f32 %v780, 0.0
        %v809 = vmax.f32 %v785, 0.0
        %v810 = vmax.f32 %v788, 0.0
        %v811 = vmax.f32 %v793, 0.0
        %v812 = vmax.f32 %v796, 0.0
        %v813 = vpack.c.bf16 %v800, %v799
        %v814 = vpack.c.bf16 %v802, %v801
        %v815 = vpack.c.bf16 %v804, %v803
        %v816 = vpack.c.bf16 %v806, %v805
        %v817 = vpack.c.bf16 %v808, %v807
        %v818 = vpack.c.bf16 %v810, %v809
        %v819 = vpack.c.bf16 %v812, %v811
        %v820 = vld [vmem:[%s5] sm:$0xf]
        %v821 = vld [vmem:[%s5 + $0x4] sm:$0xf]
        %v822 = vld [vmem:[%s5 + $0x8] sm:$0xf]
        %v823 = vld [vmem:[%s5 + $0xc] sm:$0xf]
        %v824 = vld [vmem:[%s5 + $0x10] sm:$0xf]
        %v825 = vld [vmem:[%s5 + $0x14] sm:$0xf]
        %v826 = vld [vmem:[%s5 + $0x18] sm:$0xf]
        %v827 = vld [vmem:[%s5 + $0x1c] sm:$0xf]
        %v828 = vld [vmem:[%s6] sm:$0x1]
        %v830 = vlaneseq
        %v831 = vshrl.u32 %v830, 7
        %v832 = vsub.s32 0, %v831
        %v833 = vrot.slane %v828, %v832
        %v843 = vunpack.c.l.b16 %v820
        %v844 = vunpack.c.l.b16 %v821
        %v845 = vunpack.c.l.b16 %v822
        %v846 = vunpack.c.l.b16 %v823
        %v847 = vunpack.c.l.b16 %v824
        %v848 = vunpack.c.l.b16 %v825
        %v849 = vunpack.c.l.b16 %v826
        %v850 = vunpack.c.l.b16 %v827
        %v851 = vpack.c.b16 %v844, %v843
        %v852 = vpack.c.b16 %v846, %v845
        %v853 = vpack.c.b16 %v848, %v847
        %v854 = vpack.c.b16 %v850, %v849
        %vm859 = vcmask 523264
        %v861 = vsel %vm859, %v813, 0
        %v864 = vsel %vm859, %v814, 0
        %v867 = vsel %vm859, %v815, 0
        %v870 = vsel %vm859, %v816, 0
        %v873 = vsel %vm859, %v817, 0
        %v876 = vsel %vm859, %v818, 0
        %v879 = vsel %vm859, %v819, 0
        %881 = vmatprep.subr.bf16.mxu0 0
        %882 = vmatpush1.bf16.msra.mxu0 %v851
        %883 = vmatprep.subr.bf16.mxu0 0
        %884 = vmatpush1.bf16.msra.mxu0 %v852
        %885 = vmatprep.subr.bf16.mxu0 0
        %886 = vmatpush1.bf16.msra.mxu0 %v853
        %887 = vmatprep.subr.bf16.mxu0 0
        %888 = vmatpush1.bf16.msra.mxu0 %v854
        %889 = vmatprep.subr.bf16.mxu0 0
        %890 = vmatpush1.bf16.msra.mxu0 0
        %891 = vmatprep.subr.bf16.mxu0 0
        %892 = vmatpush1.bf16.msra.mxu0 0
        %893 = vmatprep.subr.bf16.mxu0 0
        %894 = vmatpush1.bf16.msra.mxu0 0
        %895 = vmatprep.subr.bf16.mxu0 0
        %896 = vmatpush1.bf16.msra.mxu0 0
        %897 = vmatprep.subr.bf16.mxu0 0
        %898 = vmatpush1.bf16.msra.mxu0 0
        %899 = vmatprep.subr.bf16.mxu0 0
        %900 = vmatpush1.bf16.msra.mxu0 0
        %901 = vmatprep.subr.bf16.mxu0 0
        %902 = vmatpush1.bf16.msra.mxu0 0
        %903 = vmatprep.subr.bf16.mxu0 0
        %904 = vmatpush1.bf16.msra.mxu0 0
        %905 = vmatprep.subr.bf16.mxu0 0
        %906 = vmatpush1.bf16.msra.mxu0 0
        %907 = vmatprep.subr.bf16.mxu0 0
        %908 = vmatpush1.bf16.msra.mxu0 0
        %909 = vmatprep.subr.bf16.mxu0 0
        %910 = vmatpush1.bf16.msra.mxu0 0
        %911 = vmatprep.subr.bf16.mxu0 0
        %912 = vmatpush1.bf16.msra.mxu0 0
        %913 = vmatprep.mubr.bf16.mxu0 0
        %914 = vmatmul.mubr.bf16.gmra.mrb[0].mxu0 %v861
        %v915 = vpop.f32.mrb[0].mxu0
        %v916 = vadd.f32 %v833, %v915
        %v917 = vpop.f32.mrb[0].mxu0
        %v918 = vpop.f32.mrb[0].mxu0
        %v919 = vadd.f32 %v833, %v918
        %v920 = vpop.f32.mrb[0].mxu0
        %921 = vmatprep.mubr.bf16.mxu0 0
        %922 = vmatmul.mubr.bf16.gmra.mrb[0].mxu0 %v864
        %v923 = vpop.f32.mrb[0].mxu0
        %v924 = vadd.f32 %v833, %v923
        %v925 = vpop.f32.mrb[0].mxu0
        %v926 = vpop.f32.mrb[0].mxu0
        %v927 = vadd.f32 %v833, %v926
        %v928 = vpop.f32.mrb[0].mxu0
        %929 = vmatprep.mubr.bf16.mxu0 0
        %930 = vmatmul.mubr.bf16.gmra.mrb[0].mxu0 %v867
        %v931 = vpop.f32.mrb[0].mxu0
        %v932 = vadd.f32 %v833, %v931
        %v933 = vpop.f32.mrb[0].mxu0
        %v934 = vpop.f32.mrb[0].mxu0
        %v935 = vadd.f32 %v833, %v934
        %v936 = vpop.f32.mrb[0].mxu0
        %937 = vmatprep.mubr.bf16.mxu0 0
        %938 = vmatmul.mubr.bf16.gmra.mrb[0].mxu0 %v870
        %v939 = vpop.f32.mrb[0].mxu0
        %v940 = vadd.f32 %v833, %v939
        %v941 = vpop.f32.mrb[0].mxu0
        %v942 = vpop.f32.mrb[0].mxu0
        %v943 = vadd.f32 %v833, %v942
        %v944 = vpop.f32.mrb[0].mxu0
        %945 = vmatprep.mubr.bf16.mxu0 0
        %946 = vmatmul.mubr.bf16.gmra.mrb[0].mxu0 %v873
        %v947 = vpop.f32.mrb[0].mxu0
        %v948 = vadd.f32 %v833, %v947
        %v949 = vpop.f32.mrb[0].mxu0
        %v950 = vpop.f32.mrb[0].mxu0
        %v951 = vadd.f32 %v833, %v950
        %v952 = vpop.f32.mrb[0].mxu0
        %953 = vmatprep.mubr.bf16.mxu0 0
        %954 = vmatmul.mubr.bf16.gmra.mrb[0].mxu0 %v876
        %v955 = vpop.f32.mrb[0].mxu0
        %v956 = vadd.f32 %v833, %v955
        %v957 = vpop.f32.mrb[0].mxu0
        %v958 = vpop.f32.mrb[0].mxu0
        %v959 = vadd.f32 %v833, %v958
        %v960 = vpop.f32.mrb[0].mxu0
        %961 = vmatprep.mubr.bf16.mxu0 0
        %962 = vmatmul.mubr.bf16.gmra.mrb[0].mxu0 %v879
        %v963 = vpop.f32.mrb[0].mxu0
        %v964 = vadd.f32 %v833, %v963
        %v965 = vpop.f32.mrb[0].mxu0
        %v966 = vpop.f32.mrb[0].mxu0
        %v967 = vadd.f32 %v833, %v966
        %v968 = vpop.f32.mrb[0].mxu0
        %969 = vdwg.mxu0
        %v970 = vxor.u32 %v916, 2147483648
        %v971 = vxor.u32 %v919, 2147483648
        %v972 = vxor.u32 %v924, 2147483648
        %v973 = vxor.u32 %v927, 2147483648
        %v974 = vxor.u32 %v932, 2147483648
        %v975 = vxor.u32 %v935, 2147483648
        %v976 = vxor.u32 %v940, 2147483648
        %v977 = vxor.u32 %v943, 2147483648
        %v978 = vxor.u32 %v948, 2147483648
        %v979 = vxor.u32 %v951, 2147483648
        %v980 = vxor.u32 %v956, 2147483648
        %v981 = vxor.u32 %v959, 2147483648
        %v982 = vxor.u32 %v964, 2147483648
        %v983 = vxor.u32 %v967, 2147483648
        %v984 = vmul.f32 %v970, 1.442695
        %v985 = vpow.pop %v984
        %v986 = vmul.f32 %v971, 1.442695
        %v987 = vpow.pop %v986
        %v988 = vmul.f32 %v972, 1.442695
        %v989 = vpow.pop %v988
        %v990 = vmul.f32 %v973, 1.442695
        %v991 = vpow.pop %v990
        %v992 = vmul.f32 %v974, 1.442695
        %v993 = vpow.pop %v992
        %v994 = vmul.f32 %v975, 1.442695
        %v995 = vpow.pop %v994
        %v996 = vmul.f32 %v976, 1.442695
        %v997 = vpow.pop %v996
        %v998 = vmul.f32 %v977, 1.442695
        %v999 = vpow.pop %v998
        %v1000 = vmul.f32 %v978, 1.442695
        %v1001 = vpow.pop %v1000
        %v1002 = vmul.f32 %v979, 1.442695
        %v1003 = vpow.pop %v1002
        %v1004 = vmul.f32 %v980, 1.442695
        %v1005 = vpow.pop %v1004
        %v1006 = vmul.f32 %v981, 1.442695
        %v1007 = vpow.pop %v1006
        %v1008 = vmul.f32 %v982, 1.442695
        %v1009 = vpow.pop %v1008
        %v1010 = vmul.f32 %v983, 1.442695
        %v1011 = vpow.pop %v1010
        %v1012 = vadd.f32 %v985, 1.0
        %v1013 = vadd.f32 %v987, 1.0
        %v1014 = vadd.f32 %v989, 1.0
        %v1015 = vadd.f32 %v991, 1.0
        %v1016 = vadd.f32 %v993, 1.0
        %v1017 = vadd.f32 %v995, 1.0
        %v1018 = vadd.f32 %v997, 1.0
        %v1019 = vadd.f32 %v999, 1.0
        %v1020 = vadd.f32 %v1001, 1.0
        %v1021 = vadd.f32 %v1003, 1.0
        %v1022 = vadd.f32 %v1005, 1.0
        %v1023 = vadd.f32 %v1007, 1.0
        %v1024 = vadd.f32 %v1009, 1.0
        %v1025 = vadd.f32 %v1011, 1.0
        %v1026 = vrcp.pop %v1012
        %v1027 = vmul.f32 1.0, %v1026
        %v1028 = vrcp.pop %v1013
        %v1029 = vmul.f32 1.0, %v1028
        %v1030 = vrcp.pop %v1014
        %v1031 = vmul.f32 1.0, %v1030
        %v1032 = vrcp.pop %v1015
        %v1033 = vmul.f32 1.0, %v1032
        %v1034 = vrcp.pop %v1016
        %v1035 = vmul.f32 1.0, %v1034
        %v1036 = vrcp.pop %v1017
        %v1037 = vmul.f32 1.0, %v1036
        %v1038 = vrcp.pop %v1018
        %v1039 = vmul.f32 1.0, %v1038
        %v1040 = vrcp.pop %v1019
        %v1041 = vmul.f32 1.0, %v1040
        %v1042 = vrcp.pop %v1020
        %v1043 = vmul.f32 1.0, %v1042
        %v1044 = vrcp.pop %v1021
        %v1045 = vmul.f32 1.0, %v1044
        %v1046 = vrcp.pop %v1022
        %v1047 = vmul.f32 1.0, %v1046
        %v1048 = vrcp.pop %v1023
        %v1049 = vmul.f32 1.0, %v1048
        %v1050 = vrcp.pop %v1024
        %v1051 = vmul.f32 1.0, %v1050
        %v1052 = vrcp.pop %v1025
        %v1053 = vmul.f32 1.0, %v1052
        %v1054 = vpack.c.bf16 %v1029, %v1027
        %v1055 = vpack.c.bf16 %v1033, %v1031
        %v1056 = vpack.c.bf16 %v1037, %v1035
        %v1057 = vpack.c.bf16 %v1041, %v1039
        %v1058 = vpack.c.bf16 %v1045, %v1043
        %v1059 = vpack.c.bf16 %v1049, %v1047
        %v1060 = vpack.c.bf16 %v1053, %v1051
        %v1061 = vld [vmem:[%s7] sm:$0xf]
        %v1062 = vld [vmem:[%s7 + $0x4] sm:$0xf]
        %v1063 = vld [vmem:[%s7 + $0x8] sm:$0xf]
        %v1064 = vld [vmem:[%s7 + $0xc] sm:$0xf]
        %v1065 = vld [vmem:[%s7 + $0x10] sm:$0xf]
        %v1066 = vld [vmem:[%s7 + $0x14] sm:$0xf]
        %v1067 = vld [vmem:[%s7 + $0x18] sm:$0xf]
        %v1068 = vld [vmem:[%s7 + $0x1c] sm:$0xf]
        %v1069 = vld [vmem:[%s7 + $0x20] sm:$0xf]
        %v1070 = vld [vmem:[%s7 + $0x24] sm:$0xf]
        %v1071 = vld [vmem:[%s7 + $0x28] sm:$0xf]
        %v1072 = vld [vmem:[%s7 + $0x2c] sm:$0xf]
        %v1073 = vld [vmem:[%s7 + $0x30] sm:$0xf]
        %v1074 = vld [vmem:[%s7 + $0x34] sm:$0xf]
        %v1075 = vld [vmem:[%s7 + $0x38] sm:$0xf]
        %v1076 = vld [vmem:[%s7 + $0x3c] sm:$0xf]
        %v1077 = vld [vmem:[%s8] sm:$0x1]
        %v1079 = vlaneseq
        %v1080 = vshrl.u32 %v1079, 7
        %v1081 = vsub.s32 0, %v1080
        %v1082 = vrot.slane %v1077, %v1081
        %v1100 = vunpack.c.l.b16 %v1061
        %v1101 = vunpack.c.l.b16 %v1062
        %v1102 = vunpack.c.l.b16 %v1063
        %v1103 = vunpack.c.l.b16 %v1064
        %v1104 = vunpack.c.l.b16 %v1065
        %v1105 = vunpack.c.l.b16 %v1066
        %v1106 = vunpack.c.l.b16 %v1067
        %v1107 = vunpack.c.l.b16 %v1068
        %v1108 = vunpack.c.l.b16 %v1069
        %v1109 = vunpack.c.l.b16 %v1070
        %v1110 = vunpack.c.l.b16 %v1071
        %v1111 = vunpack.c.l.b16 %v1072
        %v1112 = vunpack.c.l.b16 %v1073
        %v1113 = vunpack.c.l.b16 %v1074
        %v1114 = vunpack.c.l.b16 %v1075
        %v1115 = vunpack.c.l.b16 %v1076
        %v1116 = vpack.c.b16 %v1101, %v1100
        %v1117 = vpack.c.b16 %v1103, %v1102
        %v1118 = vpack.c.b16 %v1105, %v1104
        %v1119 = vpack.c.b16 %v1107, %v1106
        %v1120 = vpack.c.b16 %v1109, %v1108
        %v1121 = vpack.c.b16 %v1111, %v1110
        %v1122 = vpack.c.b16 %v1113, %v1112
        %v1123 = vpack.c.b16 %v1115, %v1114
        %1132 = vmatprep.subr.bf16.mxu0 0
        %1133 = vmatpush1.bf16.msra.mxu0 %v1116
        %1134 = vmatprep.subr.bf16.mxu0 0
        %1135 = vmatpush1.bf16.msra.mxu0 %v1117
        %1136 = vmatprep.subr.bf16.mxu0 0
        %1137 = vmatpush1.bf16.msra.mxu0 %v1118
        %1138 = vmatprep.subr.bf16.mxu0 0
        %1139 = vmatpush1.bf16.msra.mxu0 %v1119
        %1140 = vmatprep.subr.bf16.mxu0 0
        %1141 = vmatpush1.bf16.msra.mxu0 %v1120
        %1142 = vmatprep.subr.bf16.mxu0 0
        %1143 = vmatpush1.bf16.msra.mxu0 %v1121
        %1144 = vmatprep.subr.bf16.mxu0 0
        %1145 = vmatpush1.bf16.msra.mxu0 %v1122
        %1146 = vmatprep.subr.bf16.mxu0 0
        %1147 = vmatpush1.bf16.msra.mxu0 %v1123
        %1148 = vmatprep.subr.bf16.mxu0 0
        %1149 = vmatpush1.bf16.msra.mxu0 0
        %1150 = vmatprep.subr.bf16.mxu0 0
        %1151 = vmatpush1.bf16.msra.mxu0 0
        %1152 = vmatprep.subr.bf16.mxu0 0
        %1153 = vmatpush1.bf16.msra.mxu0 0
        %1154 = vmatprep.subr.bf16.mxu0 0
        %1155 = vmatpush1.bf16.msra.mxu0 0
        %1156 = vmatprep.subr.bf16.mxu0 0
        %1157 = vmatpush1.bf16.msra.mxu0 0
        %1158 = vmatprep.subr.bf16.mxu0 0
        %1159 = vmatpush1.bf16.msra.mxu0 0
        %1160 = vmatprep.subr.bf16.mxu0 0
        %1161 = vmatpush1.bf16.msra.mxu0 0
        %1162 = vmatprep.subr.bf16.mxu0 0
        %1163 = vmatpush1.bf16.msra.mxu0 0
        %1164 = vmatprep.mubr.bf16.mxu0 0
        %1165 = vmatmul.mubr.bf16.gmra.mrb[0].mxu0 %v1054
        %v1166 = vpop.f32.mrb[0].mxu0
        %v1167 = vadd.f32 %v1082, %v1166
        %v1168 = vpop.f32.mrb[0].mxu0
        %v1169 = vpop.f32.mrb[0].mxu0
        %v1170 = vadd.f32 %v1082, %v1169
        %v1171 = vpop.f32.mrb[0].mxu0
        %1172 = vmatprep.mubr.bf16.mxu0 0
        %1173 = vmatmul.mubr.bf16.gmra.mrb[0].mxu0 %v1055
        %v1174 = vpop.f32.mrb[0].mxu0
        %v1175 = vadd.f32 %v1082, %v1174
        %v1176 = vpop.f32.mrb[0].mxu0
        %v1177 = vpop.f32.mrb[0].mxu0
        %v1178 = vadd.f32 %v1082, %v1177
        %v1179 = vpop.f32.mrb[0].mxu0
        %1180 = vmatprep.mubr.bf16.mxu0 0
        %1181 = vmatmul.mubr.bf16.gmra.mrb[0].mxu0 %v1056
        %v1182 = vpop.f32.mrb[0].mxu0
        %v1183 = vadd.f32 %v1082, %v1182
        %v1184 = vpop.f32.mrb[0].mxu0
        %v1185 = vpop.f32.mrb[0].mxu0
        %v1186 = vadd.f32 %v1082, %v1185
        %v1187 = vpop.f32.mrb[0].mxu0
        %1188 = vmatprep.mubr.bf16.mxu0 0
        %1189 = vmatmul.mubr.bf16.gmra.mrb[0].mxu0 %v1057
        %v1190 = vpop.f32.mrb[0].mxu0
        %v1191 = vadd.f32 %v1082, %v1190
        %v1192 = vpop.f32.mrb[0].mxu0
        %v1193 = vpop.f32.mrb[0].mxu0
        %v1194 = vadd.f32 %v1082, %v1193
        %v1195 = vpop.f32.mrb[0].mxu0
        %1196 = vmatprep.mubr.bf16.mxu0 0
        %1197 = vmatmul.mubr.bf16.gmra.mrb[0].mxu0 %v1058
        %v1198 = vpop.f32.mrb[0].mxu0
        %v1199 = vadd.f32 %v1082, %v1198
        %v1200 = vpop.f32.mrb[0].mxu0
        %v1201 = vpop.f32.mrb[0].mxu0
        %v1202 = vadd.f32 %v1082, %v1201
        %v1203 = vpop.f32.mrb[0].mxu0
        %1204 = vmatprep.mubr.bf16.mxu0 0
        %1205 = vmatmul.mubr.bf16.gmra.mrb[0].mxu0 %v1059
        %v1206 = vpop.f32.mrb[0].mxu0
        %v1207 = vadd.f32 %v1082, %v1206
        %v1208 = vpop.f32.mrb[0].mxu0
        %v1209 = vpop.f32.mrb[0].mxu0
        %v1210 = vadd.f32 %v1082, %v1209
        %v1211 = vpop.f32.mrb[0].mxu0
        %1212 = vmatprep.mubr.bf16.mxu0 0
        %1213 = vmatmul.mubr.bf16.gmra.mrb[0].mxu0 %v1060
        %v1214 = vpop.f32.mrb[0].mxu0
        %v1215 = vadd.f32 %v1082, %v1214
        %v1216 = vpop.f32.mrb[0].mxu0
        %v1217 = vpop.f32.mrb[0].mxu0
        %v1218 = vadd.f32 %v1082, %v1217
        %v1219 = vpop.f32.mrb[0].mxu0
        %1220 = vdwg.mxu0
        %v1221 = vmax.f32 %v1167, 0.0
        %v1222 = vmax.f32 %v1170, 0.0
        %v1223 = vmax.f32 %v1175, 0.0
        %v1224 = vmax.f32 %v1178, 0.0
        %v1225 = vmax.f32 %v1183, 0.0
        %v1226 = vmax.f32 %v1186, 0.0
        %v1227 = vmax.f32 %v1191, 0.0
        %v1228 = vmax.f32 %v1194, 0.0
        %v1229 = vmax.f32 %v1199, 0.0
        %v1230 = vmax.f32 %v1202, 0.0
        %v1231 = vmax.f32 %v1207, 0.0
        %v1232 = vmax.f32 %v1210, 0.0
        %v1233 = vmax.f32 %v1215, 0.0
        %v1234 = vmax.f32 %v1218, 0.0
        %v1235 = vpack.c.bf16 %v1222, %v1221
        %v1236 = vpack.c.bf16 %v1224, %v1223
        %v1237 = vpack.c.bf16 %v1226, %v1225
        %v1238 = vpack.c.bf16 %v1228, %v1227
        %v1239 = vpack.c.bf16 %v1230, %v1229
        %v1240 = vpack.c.bf16 %v1232, %v1231
        %v1241 = vpack.c.bf16 %v1234, %v1233
        %v1242 = vld [vmem:[%s9] sm:$0xf]
        %v1243 = vld [vmem:[%s9 + $0x4] sm:$0xf]
        %v1244 = vld [vmem:[%s9 + $0x8] sm:$0xf]
        %v1245 = vld [vmem:[%s9 + $0xc] sm:$0xf]
        %v1246 = vld [vmem:[%s9 + $0x10] sm:$0xf]
        %v1247 = vld [vmem:[%s9 + $0x14] sm:$0xf]
        %v1248 = vld [vmem:[%s9 + $0x18] sm:$0xf]
        %v1249 = vld [vmem:[%s9 + $0x1c] sm:$0xf]
        %v1250 = vld [vmem:[%s10] sm:$0x1]
        %v1252 = vlaneseq
        %v1253 = vshrl.u32 %v1252, 7
        %v1254 = vsub.s32 0, %v1253
        %v1255 = vrot.slane %v1250, %v1254
        %v1265 = vunpack.c.l.b16 %v1242
        %v1266 = vunpack.c.l.b16 %v1243
        %v1267 = vunpack.c.l.b16 %v1244
        %v1268 = vunpack.c.l.b16 %v1245
        %v1269 = vunpack.c.l.b16 %v1246
        %v1270 = vunpack.c.l.b16 %v1247
        %v1271 = vunpack.c.l.b16 %v1248
        %v1272 = vunpack.c.l.b16 %v1249
        %v1273 = vpack.c.b16 %v1266, %v1265
        %v1274 = vpack.c.b16 %v1268, %v1267
        %v1275 = vpack.c.b16 %v1270, %v1269
        %v1276 = vpack.c.b16 %v1272, %v1271
        %v1282 = vsel %vm859, %v1235, 0
        %v1285 = vsel %vm859, %v1236, 0
        %v1288 = vsel %vm859, %v1237, 0
        %v1291 = vsel %vm859, %v1238, 0
        %v1294 = vsel %vm859, %v1239, 0
        %v1297 = vsel %vm859, %v1240, 0
        %v1300 = vsel %vm859, %v1241, 0
        %1302 = vmatprep.subr.bf16.mxu0 0
        %1303 = vmatpush1.bf16.msra.mxu0 %v1273
        %1304 = vmatprep.subr.bf16.mxu0 0
        %1305 = vmatpush1.bf16.msra.mxu0 %v1274
        %1306 = vmatprep.subr.bf16.mxu0 0
        %1307 = vmatpush1.bf16.msra.mxu0 %v1275
        %1308 = vmatprep.subr.bf16.mxu0 0
        %1309 = vmatpush1.bf16.msra.mxu0 %v1276
        %1310 = vmatprep.subr.bf16.mxu0 0
        %1311 = vmatpush1.bf16.msra.mxu0 0
        %1312 = vmatprep.subr.bf16.mxu0 0
        %1313 = vmatpush1.bf16.msra.mxu0 0
        %1314 = vmatprep.subr.bf16.mxu0 0
        %1315 = vmatpush1.bf16.msra.mxu0 0
        %1316 = vmatprep.subr.bf16.mxu0 0
        %1317 = vmatpush1.bf16.msra.mxu0 0
        %1318 = vmatprep.subr.bf16.mxu0 0
        %1319 = vmatpush1.bf16.msra.mxu0 0
        %1320 = vmatprep.subr.bf16.mxu0 0
        %1321 = vmatpush1.bf16.msra.mxu0 0
        %1322 = vmatprep.subr.bf16.mxu0 0
        %1323 = vmatpush1.bf16.msra.mxu0 0
        %1324 = vmatprep.subr.bf16.mxu0 0
        %1325 = vmatpush1.bf16.msra.mxu0 0
        %1326 = vmatprep.subr.bf16.mxu0 0
        %1327 = vmatpush1.bf16.msra.mxu0 0
        %1328 = vmatprep.subr.bf16.mxu0 0
        %1329 = vmatpush1.bf16.msra.mxu0 0
        %1330 = vmatprep.subr.bf16.mxu0 0
        %1331 = vmatpush1.bf16.msra.mxu0 0
        %1332 = vmatprep.subr.bf16.mxu0 0
        %1333 = vmatpush1.bf16.msra.mxu0 0
        %1334 = vmatprep.mubr.bf16.mxu0 0
        %1335 = vmatmul.mubr.bf16.gmra.mrb[0].mxu0 %v1282
        %v1336 = vpop.f32.mrb[0].mxu0
        %v1337 = vadd.f32 %v1255, %v1336
        %v1338 = vpop.f32.mrb[0].mxu0
        %v1339 = vpop.f32.mrb[0].mxu0
        %v1340 = vadd.f32 %v1255, %v1339
        %v1341 = vpop.f32.mrb[0].mxu0
        %1342 = vmatprep.mubr.bf16.mxu0 0
        %1343 = vmatmul.mubr.bf16.gmra.mrb[0].mxu0 %v1285
        %v1344 = vpop.f32.mrb[0].mxu0
        %v1345 = vadd.f32 %v1255, %v1344
        %v1346 = vpop.f32.mrb[0].mxu0
        %v1347 = vpop.f32.mrb[0].mxu0
        %v1348 = vadd.f32 %v1255, %v1347
        %v1349 = vpop.f32.mrb[0].mxu0
        %1350 = vmatprep.mubr.bf16.mxu0 0
        %1351 = vmatmul.mubr.bf16.gmra.mrb[0].mxu0 %v1288
        %v1352 = vpop.f32.mrb[0].mxu0
        %v1353 = vadd.f32 %v1255, %v1352
        %v1354 = vpop.f32.mrb[0].mxu0
        %v1355 = vpop.f32.mrb[0].mxu0
        %v1356 = vadd.f32 %v1255, %v1355
        %v1357 = vpop.f32.mrb[0].mxu0
        %1358 = vmatprep.mubr.bf16.mxu0 0
        %1359 = vmatmul.mubr.bf16.gmra.mrb[0].mxu0 %v1291
        %v1360 = vpop.f32.mrb[0].mxu0
        %v1361 = vadd.f32 %v1255, %v1360
        %v1362 = vpop.f32.mrb[0].mxu0
        %v1363 = vpop.f32.mrb[0].mxu0
        %v1364 = vadd.f32 %v1255, %v1363
        %v1365 = vpop.f32.mrb[0].mxu0
        %1366 = vmatprep.mubr.bf16.mxu0 0
        %1367 = vmatmul.mubr.bf16.gmra.mrb[0].mxu0 %v1294
        %v1368 = vpop.f32.mrb[0].mxu0
        %v1369 = vadd.f32 %v1255, %v1368
        %v1370 = vpop.f32.mrb[0].mxu0
        %v1371 = vpop.f32.mrb[0].mxu0
        %v1372 = vadd.f32 %v1255, %v1371
        %v1373 = vpop.f32.mrb[0].mxu0
        %1374 = vmatprep.mubr.bf16.mxu0 0
        %1375 = vmatmul.mubr.bf16.gmra.mrb[0].mxu0 %v1297
        %v1376 = vpop.f32.mrb[0].mxu0
        %v1377 = vadd.f32 %v1255, %v1376
        %v1378 = vpop.f32.mrb[0].mxu0
        %v1379 = vpop.f32.mrb[0].mxu0
        %v1380 = vadd.f32 %v1255, %v1379
        %v1381 = vpop.f32.mrb[0].mxu0
        %1382 = vmatprep.mubr.bf16.mxu0 0
        %1383 = vmatmul.mubr.bf16.gmra.mrb[0].mxu0 %v1300
        %v1384 = vpop.f32.mrb[0].mxu0
        %v1385 = vadd.f32 %v1255, %v1384
        %v1386 = vpop.f32.mrb[0].mxu0
        %v1387 = vpop.f32.mrb[0].mxu0
        %v1388 = vadd.f32 %v1255, %v1387
        %v1389 = vpop.f32.mrb[0].mxu0
        %1390 = vdwg.mxu0
        %v1391 = vmax.f32 %v1337, 0.0
        %v1392 = vmax.f32 %v1340, 0.0
        %v1393 = vmax.f32 %v1345, 0.0
        %v1394 = vmax.f32 %v1348, 0.0
        %v1395 = vmax.f32 %v1353, 0.0
        %v1396 = vmax.f32 %v1356, 0.0
        %v1397 = vmax.f32 %v1361, 0.0
        %v1398 = vmax.f32 %v1364, 0.0
        %v1399 = vmax.f32 %v1369, 0.0
        %v1400 = vmax.f32 %v1372, 0.0
        %v1401 = vmax.f32 %v1377, 0.0
        %v1402 = vmax.f32 %v1380, 0.0
        %v1403 = vmax.f32 %v1385, 0.0
        %v1404 = vmax.f32 %v1388, 0.0
        %v1405 = vpack.c.bf16 %v1392, %v1391
        %v1406 = vpack.c.bf16 %v1394, %v1393
        %v1407 = vpack.c.bf16 %v1396, %v1395
        %v1408 = vpack.c.bf16 %v1398, %v1397
        %v1409 = vpack.c.bf16 %v1400, %v1399
        %v1410 = vpack.c.bf16 %v1402, %v1401
        %v1411 = vpack.c.bf16 %v1404, %v1403
        %v1412 = vld [vmem:[%s11] sm:$0xf]
        %v1413 = vld [vmem:[%s11 + $0x4] sm:$0xf]
        %v1414 = vld [vmem:[%s11 + $0x8] sm:$0xf]
        %v1415 = vld [vmem:[%s11 + $0xc] sm:$0xf]
        %v1416 = vld [vmem:[%s11 + $0x10] sm:$0xf]
        %v1417 = vld [vmem:[%s11 + $0x14] sm:$0xf]
        %v1418 = vld [vmem:[%s11 + $0x18] sm:$0xf]
        %v1419 = vld [vmem:[%s11 + $0x1c] sm:$0xf]
        %v1420 = vld [vmem:[%s11 + $0x20] sm:$0xf]
        %v1421 = vld [vmem:[%s11 + $0x24] sm:$0xf]
        %v1422 = vld [vmem:[%s11 + $0x28] sm:$0xf]
        %v1423 = vld [vmem:[%s11 + $0x2c] sm:$0xf]
        %v1424 = vld [vmem:[%s11 + $0x30] sm:$0xf]
        %v1425 = vld [vmem:[%s11 + $0x34] sm:$0xf]
        %v1426 = vld [vmem:[%s11 + $0x38] sm:$0xf]
        %v1427 = vld [vmem:[%s11 + $0x3c] sm:$0xf]
        %v1428 = vld [vmem:[%s12] sm:$0x1]
        %v1430 = vlaneseq
        %v1431 = vshrl.u32 %v1430, 7
        %v1432 = vsub.s32 0, %v1431
        %v1433 = vrot.slane %v1428, %v1432
        %v1451 = vunpack.c.l.b16 %v1412
        %v1452 = vunpack.c.l.b16 %v1413
        %v1453 = vunpack.c.l.b16 %v1414
        %v1454 = vunpack.c.l.b16 %v1415
        %v1455 = vunpack.c.l.b16 %v1416
        %v1456 = vunpack.c.l.b16 %v1417
        %v1457 = vunpack.c.l.b16 %v1418
        %v1458 = vunpack.c.l.b16 %v1419
        %v1459 = vunpack.c.l.b16 %v1420
        %v1460 = vunpack.c.l.b16 %v1421
        %v1461 = vunpack.c.l.b16 %v1422
        %v1462 = vunpack.c.l.b16 %v1423
        %v1463 = vunpack.c.l.b16 %v1424
        %v1464 = vunpack.c.l.b16 %v1425
        %v1465 = vunpack.c.l.b16 %v1426
        %v1466 = vunpack.c.l.b16 %v1427
        %v1467 = vpack.c.b16 %v1452, %v1451
        %v1468 = vpack.c.b16 %v1454, %v1453
        %v1469 = vpack.c.b16 %v1456, %v1455
        %v1470 = vpack.c.b16 %v1458, %v1457
        %v1471 = vpack.c.b16 %v1460, %v1459
        %v1472 = vpack.c.b16 %v1462, %v1461
        %v1473 = vpack.c.b16 %v1464, %v1463
        %v1474 = vpack.c.b16 %v1466, %v1465
        %1483 = vmatprep.subr.bf16.mxu0 0
        %1484 = vmatpush1.bf16.msra.mxu0 %v1467
        %1485 = vmatprep.subr.bf16.mxu0 0
        %1486 = vmatpush1.bf16.msra.mxu0 %v1468
        %1487 = vmatprep.subr.bf16.mxu0 0
        %1488 = vmatpush1.bf16.msra.mxu0 %v1469
        %1489 = vmatprep.subr.bf16.mxu0 0
        %1490 = vmatpush1.bf16.msra.mxu0 %v1470
        %1491 = vmatprep.subr.bf16.mxu0 0
        %1492 = vmatpush1.bf16.msra.mxu0 %v1471
        %1493 = vmatprep.subr.bf16.mxu0 0
        %1494 = vmatpush1.bf16.msra.mxu0 %v1472
        %1495 = vmatprep.subr.bf16.mxu0 0
        %1496 = vmatpush1.bf16.msra.mxu0 %v1473
        %1497 = vmatprep.subr.bf16.mxu0 0
        %1498 = vmatpush1.bf16.msra.mxu0 %v1474
        %1499 = vmatprep.subr.bf16.mxu0 0
        %1500 = vmatpush1.bf16.msra.mxu0 0
        %1501 = vmatprep.subr.bf16.mxu0 0
        %1502 = vmatpush1.bf16.msra.mxu0 0
        %1503 = vmatprep.subr.bf16.mxu0 0
        %1504 = vmatpush1.bf16.msra.mxu0 0
        %1505 = vmatprep.subr.bf16.mxu0 0
        %1506 = vmatpush1.bf16.msra.mxu0 0
        %1507 = vmatprep.subr.bf16.mxu0 0
        %1508 = vmatpush1.bf16.msra.mxu0 0
        %1509 = vmatprep.subr.bf16.mxu0 0
        %1510 = vmatpush1.bf16.msra.mxu0 0
        %1511 = vmatprep.subr.bf16.mxu0 0
        %1512 = vmatpush1.bf16.msra.mxu0 0
        %1513 = vmatprep.subr.bf16.mxu0 0
        %1514 = vmatpush1.bf16.msra.mxu0 0
        %1515 = vmatprep.mubr.bf16.mxu0 0
        %1516 = vmatmul.mubr.bf16.gmra.mrb[0].mxu0 %v1405
        %v1517 = vpop.f32.mrb[0].mxu0
        %v1518 = vadd.f32 %v1433, %v1517
        %v1519 = vpop.f32.mrb[0].mxu0
        %v1520 = vpop.f32.mrb[0].mxu0
        %v1521 = vadd.f32 %v1433, %v1520
        %v1522 = vpop.f32.mrb[0].mxu0
        %1523 = vmatprep.mubr.bf16.mxu0 0
        %1524 = vmatmul.mubr.bf16.gmra.mrb[0].mxu0 %v1406
        %v1525 = vpop.f32.mrb[0].mxu0
        %v1526 = vadd.f32 %v1433, %v1525
        %v1527 = vpop.f32.mrb[0].mxu0
        %v1528 = vpop.f32.mrb[0].mxu0
        %v1529 = vadd.f32 %v1433, %v1528
        %v1530 = vpop.f32.mrb[0].mxu0
        %1531 = vmatprep.mubr.bf16.mxu0 0
        %1532 = vmatmul.mubr.bf16.gmra.mrb[0].mxu0 %v1407
        %v1533 = vpop.f32.mrb[0].mxu0
        %v1534 = vadd.f32 %v1433, %v1533
        %v1535 = vpop.f32.mrb[0].mxu0
        %v1536 = vpop.f32.mrb[0].mxu0
        %v1537 = vadd.f32 %v1433, %v1536
        %v1538 = vpop.f32.mrb[0].mxu0
        %1539 = vmatprep.mubr.bf16.mxu0 0
        %1540 = vmatmul.mubr.bf16.gmra.mrb[0].mxu0 %v1408
        %v1541 = vpop.f32.mrb[0].mxu0
        %v1542 = vadd.f32 %v1433, %v1541
        %v1543 = vpop.f32.mrb[0].mxu0
        %v1544 = vpop.f32.mrb[0].mxu0
        %v1545 = vadd.f32 %v1433, %v1544
        %v1546 = vpop.f32.mrb[0].mxu0
        %1547 = vmatprep.mubr.bf16.mxu0 0
        %1548 = vmatmul.mubr.bf16.gmra.mrb[0].mxu0 %v1409
        %v1549 = vpop.f32.mrb[0].mxu0
        %v1550 = vadd.f32 %v1433, %v1549
        %v1551 = vpop.f32.mrb[0].mxu0
        %v1552 = vpop.f32.mrb[0].mxu0
        %v1553 = vadd.f32 %v1433, %v1552
        %v1554 = vpop.f32.mrb[0].mxu0
        %1555 = vmatprep.mubr.bf16.mxu0 0
        %1556 = vmatmul.mubr.bf16.gmra.mrb[0].mxu0 %v1410
        %v1557 = vpop.f32.mrb[0].mxu0
        %v1558 = vadd.f32 %v1433, %v1557
        %v1559 = vpop.f32.mrb[0].mxu0
        %v1560 = vpop.f32.mrb[0].mxu0
        %v1561 = vadd.f32 %v1433, %v1560
        %v1562 = vpop.f32.mrb[0].mxu0
        %1563 = vmatprep.mubr.bf16.mxu0 0
        %1564 = vmatmul.mubr.bf16.gmra.mrb[0].mxu0 %v1411
        %v1565 = vpop.f32.mrb[0].mxu0
        %v1566 = vadd.f32 %v1433, %v1565
        %v1567 = vpop.f32.mrb[0].mxu0
        %v1568 = vpop.f32.mrb[0].mxu0
        %v1569 = vadd.f32 %v1433, %v1568
        %v1570 = vpop.f32.mrb[0].mxu0
        %1571 = vdwg.mxu0
        %1572 = vst.msk [vmem:[%s442] sm:$0xff] %vm507, %v1518
        %1573 = vst.msk [vmem:[%s442 + $0x8] sm:$0xff] %vm507, %v1521
        %1574 = vst.msk [vmem:[%s442 + $0x10] sm:$0xff] %vm507, %v1526
        %1575 = vst.msk [vmem:[%s442 + $0x18] sm:$0xff] %vm507, %v1529
        %1576 = vst.msk [vmem:[%s442 + $0x20] sm:$0xff] %vm507, %v1534
        %1577 = vst.msk [vmem:[%s442 + $0x28] sm:$0xff] %vm507, %v1537
        %1578 = vst.msk [vmem:[%s442 + $0x30] sm:$0xff] %vm507, %v1542
        %1579 = vst.msk [vmem:[%s442 + $0x38] sm:$0xff] %vm507, %v1545
        %1580 = vst.msk [vmem:[%s442 + $0x40] sm:$0xff] %vm507, %v1550
        %1581 = vst.msk [vmem:[%s442 + $0x48] sm:$0xff] %vm507, %v1553
        %1582 = vst.msk [vmem:[%s442 + $0x50] sm:$0xff] %vm507, %v1558
        %1583 = vst.msk [vmem:[%s442 + $0x58] sm:$0xff] %vm507, %v1561
        %1584 = vst.msk [vmem:[%s442 + $0x60] sm:$0xff] %vm507, %v1566
        %1585 = vst.msk [vmem:[%s442 + $0x68] sm:$0xff] %vm507, %v1569
        %s1586 = sand.u32 %s310, 1
        %s1587 = sand.u32 %s310, 1
        %s1588 = smul.addr %s1587, 112
        %s1589 = scalar_lea.vmem [#allocation2], %s1588
        // Predicated region
        $region73: #{_lambda_.1} parent=71 // pred_check
          %p1590 = pneg %p320
        $region74: #{_lambda_.1} parent=71 // pred_check_branch
          %1592 = sbr.rel (%p1590) target = $region76
        $region75: #{_lambda_.1} parent=71 // pred_region
          %s1593 = smul.u32 14, %s24
          %s1594 = ssub.s32 25, %s1593
          %p1595 = scmp.lt.s32.totalorder %s1594, 14
          %s1596 = scalar_select %p1595, %s1594, 14
          %s1597 = smul.u32 128, %s1596
          %p1598 = scmp.ne.s32.totalorder 0, %s1597
          %s1599 = smul.addr %s1593, 8
          %s1600 = scalar_lea.vmem %s13, %s1599
          // Predicated region
          $region77: #{_lambda_.1} parent=75 // pred_check
            %p1601 = pneg %p1598
          $region78: #{_lambda_.1} parent=75 // pred_check_branch
            %1603 = sbr.rel (%p1601) target = $region80
          $region79: #{_lambda_.1} parent=75 // pred_region
            // Predicated region
            $region81: #{_lambda_.1} parent=79 // pred_check
              _
            $region82: #{_lambda_.1} parent=79 // pred_check_branch
              %1605 = sbr.rel (0) target = $region84
            $region83: #{_lambda_.1} parent=79 // pred_region
              // Predicated region
              $region103: #{_lambda_.1} parent=83 // pred_check
                _
              $region104: #{_lambda_.1} parent=83 // pred_check_branch
                %1681 = sbr.rel (0) target = $region106
              $region105: #{_lambda_.1} parent=83 // pred_region
                %s1682 = sdiv.u32.pop %s1596, 14
                %s1683 = srem.u32.pop %s1596, 14
                // While loop
                $region107: #{_lambda_.1} parent=105 // loop_pre_header
                  _
                $region108: #{_lambda_.1} parent=105 // loop_header
                  %s1685 = sphi 0, %s1687
                  %p1686 = scmp.ge.s32.totalorder %s1685, %s1682
                  %s1690 = sphi 0, %s1723
                  %s1691 = sphi %s1589, %s1726
                  %s1692 = sphi %s1600, %s1727
                $region109: #{_lambda_.1} parent=105 // loop_header_branch
                  %1689 = sbr.rel (%p1686) target = $region113
                $region110: #{_lambda_.1} parent=105 // loop_body
                  %v1693 = vld [vmem:[%s1691] sm:$0xff]
                  %1694 = vst [vmem:[%s1692] sm:$0xff] %v1693
                  %v1695 = vld [vmem:[%s1691 + $0x8] sm:$0xff]
                  %1696 = vst [vmem:[%s1692 + $0x8] sm:$0xff] %v1695
                  %v1697 = vld [vmem:[%s1691 + $0x10] sm:$0xff]
                  %1698 = vst [vmem:[%s1692 + $0x10] sm:$0xff] %v1697
                  %v1699 = vld [vmem:[%s1691 + $0x18] sm:$0xff]
                  %1700 = vst [vmem:[%s1692 + $0x18] sm:$0xff] %v1699
                  %v1701 = vld [vmem:[%s1691 + $0x20] sm:$0xff]
                  %1702 = vst [vmem:[%s1692 + $0x20] sm:$0xff] %v1701
                  %v1703 = vld [vmem:[%s1691 + $0x28] sm:$0xff]
                  %1704 = vst [vmem:[%s1692 + $0x28] sm:$0xff] %v1703
                  %v1705 = vld [vmem:[%s1691 + $0x30] sm:$0xff]
                  %1706 = vst [vmem:[%s1692 + $0x30] sm:$0xff] %v1705
                  %v1707 = vld [vmem:[%s1691 + $0x38] sm:$0xff]
                  %1708 = vst [vmem:[%s1692 + $0x38] sm:$0xff] %v1707
                  %v1709 = vld [vmem:[%s1691 + $0x40] sm:$0xff]
                  %1710 = vst [vmem:[%s1692 + $0x40] sm:$0xff] %v1709
                  %v1711 = vld [vmem:[%s1691 + $0x48] sm:$0xff]
                  %1712 = vst [vmem:[%s1692 + $0x48] sm:$0xff] %v1711
                  %v1713 = vld [vmem:[%s1691 + $0x50] sm:$0xff]
                  %1714 = vst [vmem:[%s1692 + $0x50] sm:$0xff] %v1713
                  %v1715 = vld [vmem:[%s1691 + $0x58] sm:$0xff]
                  %1716 = vst [vmem:[%s1692 + $0x58] sm:$0xff] %v1715
                  %v1717 = vld [vmem:[%s1691 + $0x60] sm:$0xff]
                  %1718 = vst [vmem:[%s1692 + $0x60] sm:$0xff] %v1717
                  %v1719 = vld [vmem:[%s1691 + $0x68] sm:$0xff]
                  %1720 = vst [vmem:[%s1692 + $0x68] sm:$0xff] %v1719
                  %s1721 = sadd.s32 1, %s1690
                  %p1722 = scmp.ge.s32.totalorder %s1721, %s1682
                  %s1723 = scalar_select %p1722, 0, %s1721
                  %s1724 = smul.u32 %s1723, 112
                  %s1725 = smul.u32 %s1723, 112
                  %s1726 = scalar_lea.vmem %s1589, %s1724 [#allocation2]
                  %s1727 = scalar_lea.vmem %s1600, %s1725
                $region111: #{_lambda_.1} parent=105 // loop_footer
                  %s1687 = sadd.s32 %s1685, 1
                $region112: #{_lambda_.1} parent=105 // loop_footer_branch
                  %1684 = sbr.rel target = $region108
                $region113: #{_lambda_.1} parent=105 // loop_exit
                  _
                %s1728 = sdiv.u32.pop %s1596, 14
                %s1729 = srem.u32.pop %s1596, 14
                %s1730 = smul.u32 %s1728, 14
                %s1731 = smul.u32 8, %s1730
                %s1732 = scalar_lea.vmem %s1589, %s1731 [#allocation2]
                %s1733 = smul.u32 8, %s1730
                %s1734 = scalar_lea.vmem %s1600, %s1733
                // While loop
                $region114: #{_lambda_.1} parent=105 // loop_pre_header
                  _
                $region115: #{_lambda_.1} parent=105 // loop_header
                  %s1736 = sphi 0, %s1738
                  %p1737 = scmp.ge.s32.totalorder %s1736, %s1729
                  %s1741 = sphi 0, %s1748
                  %s1742 = sphi %s1732, %s1751
                  %s1743 = sphi %s1734, %s1752
                $region116: #{_lambda_.1} parent=105 // loop_header_branch
                  %1740 = sbr.rel (%p1737) target = $region120
                $region117: #{_lambda_.1} parent=105 // loop_body
                  %v1744 = vld [vmem:[%s1742] sm:$0xff]
                  %1745 = vst [vmem:[%s1743] sm:$0xff] %v1744
                  %s1746 = sadd.s32 1, %s1741
                  %p1747 = scmp.ge.s32.totalorder %s1746, %s1729
                  %s1748 = scalar_select %p1747, 0, %s1746
                  %s1749 = smul.u32 %s1748, 8
                  %s1750 = smul.u32 %s1748, 8
                  %s1751 = scalar_lea.vmem %s1732, %s1749 [#allocation2]
                  %s1752 = scalar_lea.vmem %s1734, %s1750
                $region118: #{_lambda_.1} parent=105 // loop_footer
                  %s1738 = sadd.s32 %s1736, 1
                $region119: #{_lambda_.1} parent=105 // loop_footer_branch
                  %1735 = sbr.rel target = $region115
                $region120: #{_lambda_.1} parent=105 // loop_exit
                  _
              $region106: #{_lambda_.1} parent=83 // pred_fallthru
                _
              // Predicated region
              $region121: #{_lambda_.1} parent=83 // pred_check
                _
              $region122: #{_lambda_.1} parent=83 // pred_check_branch
                %1754 = sbr.rel target = $region124
              $region123: #{_lambda_.1} parent=83 // pred_region
                _
              $region124: #{_lambda_.1} parent=83 // pred_fallthru
                _
            $region84: #{_lambda_.1} parent=79 // pred_fallthru
              _
            // Predicated region
            $region85: #{_lambda_.1} parent=79 // pred_check
              _
            $region86: #{_lambda_.1} parent=79 // pred_check_branch
              %1607 = sbr.rel target = $region88
            $region87: #{_lambda_.1} parent=79 // pred_region
              %s1609 = sdiv.u32.pop %s1596, 14
              %s1610 = srem.u32.pop %s1596, 14
              // While loop
              $region89: #{_lambda_.1} parent=87 // loop_pre_header
                _
              $region90: #{_lambda_.1} parent=87 // loop_header
                %s1612 = sphi 0, %s1614
                %p1613 = scmp.ge.s32.totalorder %s1612, %s1609
                %s1617 = sphi 0, %s1650
                %s1618 = sphi %s1589, %s1653
                %s1619 = sphi %s1600, %s1654
              $region91: #{_lambda_.1} parent=87 // loop_header_branch
                %1616 = sbr.rel (%p1613) target = $region95
              $region92: #{_lambda_.1} parent=87 // loop_body
                %v1620 = vld [vmem:[%s1618] sm:$0xff]
                %1621 = vst [vmem:[%s1619] sm:$0xff] %v1620
                %v1622 = vld [vmem:[%s1618 + $0x8] sm:$0xff]
                %1623 = vst [vmem:[%s1619 + $0x8] sm:$0xff] %v1622
                %v1624 = vld [vmem:[%s1618 + $0x10] sm:$0xff]
                %1625 = vst [vmem:[%s1619 + $0x10] sm:$0xff] %v1624
                %v1626 = vld [vmem:[%s1618 + $0x18] sm:$0xff]
                %1627 = vst [vmem:[%s1619 + $0x18] sm:$0xff] %v1626
                %v1628 = vld [vmem:[%s1618 + $0x20] sm:$0xff]
                %1629 = vst [vmem:[%s1619 + $0x20] sm:$0xff] %v1628
                %v1630 = vld [vmem:[%s1618 + $0x28] sm:$0xff]
                %1631 = vst [vmem:[%s1619 + $0x28] sm:$0xff] %v1630
                %v1632 = vld [vmem:[%s1618 + $0x30] sm:$0xff]
                %1633 = vst [vmem:[%s1619 + $0x30] sm:$0xff] %v1632
                %v1634 = vld [vmem:[%s1618 + $0x38] sm:$0xff]
                %1635 = vst [vmem:[%s1619 + $0x38] sm:$0xff] %v1634
                %v1636 = vld [vmem:[%s1618 + $0x40] sm:$0xff]
                %1637 = vst [vmem:[%s1619 + $0x40] sm:$0xff] %v1636
                %v1638 = vld [vmem:[%s1618 + $0x48] sm:$0xff]
                %1639 = vst [vmem:[%s1619 + $0x48] sm:$0xff] %v1638
                %v1640 = vld [vmem:[%s1618 + $0x50] sm:$0xff]
                %1641 = vst [vmem:[%s1619 + $0x50] sm:$0xff] %v1640
                %v1642 = vld [vmem:[%s1618 + $0x58] sm:$0xff]
                %1643 = vst [vmem:[%s1619 + $0x58] sm:$0xff] %v1642
                %v1644 = vld [vmem:[%s1618 + $0x60] sm:$0xff]
                %1645 = vst [vmem:[%s1619 + $0x60] sm:$0xff] %v1644
                %v1646 = vld [vmem:[%s1618 + $0x68] sm:$0xff]
                %1647 = vst [vmem:[%s1619 + $0x68] sm:$0xff] %v1646
                %s1648 = sadd.s32 1, %s1617
                %p1649 = scmp.ge.s32.totalorder %s1648, %s1609
                %s1650 = scalar_select %p1649, 0, %s1648
                %s1651 = smul.u32 %s1650, 112
                %s1652 = smul.u32 %s1650, 112
                %s1653 = scalar_lea.vmem %s1589, %s1651 [#allocation2]
                %s1654 = scalar_lea.vmem %s1600, %s1652
              $region93: #{_lambda_.1} parent=87 // loop_footer
                %s1614 = sadd.s32 %s1612, 1
              $region94: #{_lambda_.1} parent=87 // loop_footer_branch
                %1611 = sbr.rel target = $region90
              $region95: #{_lambda_.1} parent=87 // loop_exit
                _
              %s1655 = sdiv.u32.pop %s1596, 14
              %s1656 = srem.u32.pop %s1596, 14
              %s1657 = smul.u32 %s1655, 14
              %s1658 = smul.u32 8, %s1657
              %s1659 = scalar_lea.vmem %s1589, %s1658 [#allocation2]
              %s1660 = smul.u32 8, %s1657
              %s1661 = scalar_lea.vmem %s1600, %s1660
              // While loop
              $region96: #{_lambda_.1} parent=87 // loop_pre_header
                _
              $region97: #{_lambda_.1} parent=87 // loop_header
                %s1663 = sphi 0, %s1665
                %p1664 = scmp.ge.s32.totalorder %s1663, %s1656
                %s1668 = sphi 0, %s1675
                %s1669 = sphi %s1659, %s1678
                %s1670 = sphi %s1661, %s1679
              $region98: #{_lambda_.1} parent=87 // loop_header_branch
                %1667 = sbr.rel (%p1664) target = $region102
              $region99: #{_lambda_.1} parent=87 // loop_body
                %v1671 = vld [vmem:[%s1669] sm:$0xff]
                %1672 = vst [vmem:[%s1670] sm:$0xff] %v1671
                %s1673 = sadd.s32 1, %s1668
                %p1674 = scmp.ge.s32.totalorder %s1673, %s1656
                %s1675 = scalar_select %p1674, 0, %s1673
                %s1676 = smul.u32 %s1675, 8
                %s1677 = smul.u32 %s1675, 8
                %s1678 = scalar_lea.vmem %s1659, %s1676 [#allocation2]
                %s1679 = scalar_lea.vmem %s1661, %s1677
              $region100: #{_lambda_.1} parent=87 // loop_footer
                %s1665 = sadd.s32 %s1663, 1
              $region101: #{_lambda_.1} parent=87 // loop_footer_branch
                %1662 = sbr.rel target = $region97
              $region102: #{_lambda_.1} parent=87 // loop_exit
                _
            $region88: #{_lambda_.1} parent=79 // pred_fallthru
              _
          $region80: #{_lambda_.1} parent=75 // pred_fallthru
            _
          %1755 = vnop
        $region76: #{_lambda_.1} parent=71 // pred_fallthru
          _
      $region72: #{_lambda_.1} parent=5 // pred_fallthru
        _
      %p1756 = scmp.le.s32.totalorder 2, %s19
      // Predicated region
      $region125: #{_lambda_.1} parent=5 // pred_check
        %p1757 = pneg %p1756
      $region126: #{_lambda_.1} parent=5 // pred_check_branch
        %1759 = sbr.rel (%p1757) target = $region128
      $region127: #{_lambda_.1} parent=5 // pred_region
        %s1760 = ssub.s32 %s19, 2
        // Predicated region
        $region129: #{_lambda_.1} parent=127 // pred_check
          %p1761 = pneg %p326
        $region130: #{_lambda_.1} parent=127 // pred_check_branch
          %1763 = sbr.rel (%p1761) target = $region132
        $region131: #{_lambda_.1} parent=127 // pred_region
          %s1764 = sand.u32 %s311, 1
          %s1765 = sand.u32 %s311, 1
          %s1766 = smul.addr %s1765, 112
          %s1767 = scalar_lea.vmem [#allocation2], %s1766
        $region132: #{_lambda_.1} parent=127 // pred_fallthru
          _
      $region128: #{_lambda_.1} parent=5 // pred_fallthru
        _
    $region6: #{_lambda_.1} parent=1 // loop_footer
      %s23 = sadd.s32 1, %s19
    $region7: #{_lambda_.1} parent=1 // loop_footer_branch
      %18 = sbr.rel target = $region3
    $region8: #{_lambda_.1} parent=1 // loop_exit
      _

</llo_original>
